<compile_context>
chip_gen: v6e
topology: v6e:2x2x1
jax: 0.10.0
libtpu: 0.0.40
codegen_flags: <defaults>
</compile_context>

<pallas_src>
import functools

import jax
import jax.numpy as jnp
from jax import lax
from jax.experimental import pallas as pl
from jax.experimental.pallas import tpu as pltpu

GP = 128    # per-gate lane padding (gate slices land on vreg lane-block boundaries)
HP = 128    # padded hidden width carried through the recurrence
OUTP = 128  # padded (lane-dense) output width: [policy(A) | value | zeros]


def _actor_critic_kernel(H, A, T, B,
                         x_ref,    # (T*B, D)   time-major, flattened
                         wih_ref,  # (D, 3*GP)  GRU input weights, gate-padded, transposed
                         whh_ref,  # (HP, 3*GP) GRU hidden weights, gate-padded, transposed
                         gb_ref,   # (2, 3*GP)  [b_ih ; b_hh], gate-padded
                         hw_ref,   # (HP, OUTP) fused (LayerNorm-folded) actor|critic weights
                         hb_ref,   # (1, OUTP)  fused head bias
                         out_ref): # (B, OUTP)  [policy(0:A) | value(A) | 0]
    # ---- hoisted input-side GRU matmul: one larger matmul for all timesteps ----
    gi_all = (jnp.dot(x_ref[...], wih_ref[...],
                      preferred_element_type=jnp.float32)
              + gb_ref[0:1, :])                                   # (T*B, 3*GP)
    whh = whh_ref[...]
    bhh = gb_ref[1:2, :]

    # ---- GRU recurrence (PyTorch gate order r, z, n), fully unrolled over T ----
    # Padded lanes (cols H..GP-1 of each gate) have zero weights/bias, so the padded
    # lanes of h stay exactly 0: r=z=sigmoid(0)=0.5, n=tanh(0)=0, h' = 0.5*0 + 0.5*0.
    h = jnp.zeros((B, HP), jnp.float32)
    for t in range(T):                       # static unroll: static slice offsets
        gi = gi_all[t * B:(t + 1) * B, :]                         # (B, 3*GP)
        gh = jnp.dot(h, whh, preferred_element_type=jnp.float32) + bhh
        r = jax.nn.sigmoid(gi[:, 0:GP] + gh[:, 0:GP])
        z = jax.nn.sigmoid(gi[:, GP:2 * GP] + gh[:, GP:2 * GP])
        n = jnp.tanh(gi[:, 2 * GP:3 * GP] + r * gh[:, 2 * GP:3 * GP])
        h = (1.0 - z) * n + z * h

    # ---- shared LayerNorm statistics (actor & critic LNs share mean / var) -----
    lane = lax.broadcasted_iota(jnp.int32, (B, HP), 1)
    mu = jnp.sum(h, axis=-1, keepdims=True) * (1.0 / H)           # pad lanes are 0
    c = jnp.where(lane < H, h - mu, 0.0)
    var = jnp.sum(c * c, axis=-1, keepdims=True) * (1.0 / H)
    hn = c * lax.rsqrt(var + 1e-5)                                # normalized hidden

    # ---- fused heads: one lane-dense matmul -> [logits(A) | value | junk] ------
    out = jnp.dot(hn, hw_ref[...], preferred_element_type=jnp.float32) + hb_ref[...]

    # masked softmax over the first A lanes (actor); lane A carries the raw value
    olane = lax.broadcasted_iota(jnp.int32, (B, OUTP), 1)
    logits = jnp.where(olane < A, out, -1e30)
    m = jnp.max(logits, axis=-1, keepdims=True)
    e = jnp.exp(logits - m)                                       # pad lanes -> 0
    probs = e / jnp.sum(e, axis=-1, keepdims=True)                # exact div (parity)
    out_ref[...] = jnp.where(olane == A, out, probs)


def prepare_params(params, input_dim):
    """One-time parameter preprocessing (transpose / pad / fold LayerNorm into heads)."""
    f32 = jnp.float32
    H = params["w_hh"].shape[1]
    A = params["w_actor"].shape[0]
    D = input_dim

    w_ih = params["w_ih"].astype(f32)          # (3H, D) rows = [r; z; n]
    w_hh = params["w_hh"].astype(f32)          # (3H, H)
    b_ih = params["b_ih"].astype(f32)
    b_hh = params["b_hh"].astype(f32)

    wih_pad = jnp.zeros((D, 3 * GP), f32)
    whh_pad = jnp.zeros((HP, 3 * GP), f32)
    gru_b = jnp.zeros((2, 3 * GP), f32)
    for g in range(3):
        wih_pad = wih_pad.at[:, g * GP:g * GP + H].set(w_ih[g * H:(g + 1) * H, :].T)
        whh_pad = whh_pad.at[:H, g * GP:g * GP + H].set(w_hh[g * H:(g + 1) * H, :].T)
        gru_b = gru_b.at[0, g * GP:g * GP + H].set(b_ih[g * H:(g + 1) * H])
        gru_b = gru_b.at[1, g * GP:g * GP + H].set(b_hh[g * H:(g + 1) * H])

    # Fold LayerNorm gamma/beta into the head Linear layers (exact):
    #   LN(h) @ W.T + b = hn @ (gamma[:,None]*W.T) + (beta @ W.T + b)
    wa_t = params["w_actor"].astype(f32).T     # (H, A)
    wc_t = params["w_critic"].astype(f32).T    # (H, 1)
    ga, ba = params["ln_a_g"].astype(f32), params["ln_a_b"].astype(f32)
    gc, bc = params["ln_c_g"].astype(f32), params["ln_c_b"].astype(f32)

    head_w = jnp.zeros((HP, OUTP), f32)
    head_w = head_w.at[:H, :A].set(ga[:, None] * wa_t)
    head_w = head_w.at[:H, A].set(gc * wc_t[:, 0])
    head_b = jnp.zeros((1, OUTP), f32)
    head_b = head_b.at[0, :A].set(ba @ wa_t + params["b_actor"].astype(f32))
    head_b = head_b.at[0, A].set(bc @ wc_t[:, 0] + params["b_critic"].astype(f32)[0])

    return {"wih_pad": wih_pad, "whh_pad": whh_pad, "gru_b": gru_b,
            "head_w": head_w, "head_b": head_b, "H": int(H), "A": int(A)}


def actor_critic_forward(x, prep):
    """x: (B, ..., D) float32.  Returns (policy_probs (B, A), value (B, 1))."""
    B = x.shape[0]
    D = x.shape[-1]
    x3 = x.reshape(B, -1, D).astype(jnp.float32)          # x.view(B, -1, D)
    T = x3.shape[1]
    x_tm = jnp.transpose(x3, (1, 0, 2)).reshape(T * B, D) # time-major, flattened

    H, A = prep["H"], prep["A"]
    vmem = functools.partial(pl.BlockSpec, memory_space=pltpu.MemorySpace.VMEM)
    out = pl.pallas_call(
        functools.partial(_actor_critic_kernel, H, A, T, B),
        out_shape=jax.ShapeDtypeStruct((B, OUTP), jnp.float32),
        in_specs=[vmem() for _ in range(6)],
        out_specs=vmem(),
    )(x_tm, prep["wih_pad"], prep["whh_pad"], prep["gru_b"],
      prep["head_w"], prep["head_b"])
    return out[:, :A], out[:, A:A + 1]


def _reference_forward(x, params):
    """Pure-JAX reference of the PyTorch forward (for correctness check)."""
    with jax.default_matmul_precision("highest"):
        B, D = x.shape[0], x.shape[-1]
        x3 = x.reshape(B, -1, D).astype(jnp.float32)
        H = params["w_hh"].shape[1]
        wih_t, whh_t = params["w_ih"].T, params["w_hh"].T
        bih, bhh = params["b_ih"], params["b_hh"]

        def step(h, x_t):
            gi = x_t @ wih_t + bih
            gh = h @ whh_t + bhh
            r = jax.nn.sigmoid(gi[:, :H] + gh[:, :H])
            z = jax.nn.sigmoid(gi[:, H:2 * H] + gh[:, H:2 * H])
            n = jnp.tanh(gi[:, 2 * H:] + r * gh[:, 2 * H:])
            return (1.0 - z) * n + z * h, None

        h, _ = lax.scan(step, jnp.zeros((B, H), jnp.float32),
                        jnp.transpose(x3, (1, 0, 2)))

        def ln(v, g, b):
            mu = v.mean(-1, keepdims=True)
            var = ((v - mu) ** 2).mean(-1, keepdims=True)
            return (v - mu) * lax.rsqrt(var + 1e-5) * g + b

        logits = ln(h, params["ln_a_g"], params["ln_a_b"]) @ params["w_actor"].T \
            + params["b_actor"]
        policy = jax.nn.softmax(logits, axis=-1)
        value = ln(h, params["ln_c_g"], params["ln_c_b"]) @ params["w_critic"].T \
            + params["b_critic"]
        return policy, value


if __name__ == "__main__":
    # Small shapes consistent with the module: batch=2, seq=8, input_dim=16,
    # hidden_size=32, action_dim=4.
    B, T, D, H, A = 2, 8, 16, 32, 4

    key = jax.random.PRNGKey(0)
    keys = jax.random.split(key, 10)
    k = 1.0 / jnp.sqrt(jnp.float32(H))   # PyTorch-style uniform(-1/sqrt(H), 1/sqrt(H))

    params = {
        "w_ih":     jax.random.uniform(keys[0], (3 * H, D), jnp.float32, -k, k),
        "w_hh":     jax.random.uniform(keys[1], (3 * H, H), jnp.float32, -k, k),
        "b_ih":     jax.random.uniform(keys[2], (3 * H,),   jnp.float32, -k, k),
        "b_hh":     jax.random.uniform(keys[3], (3 * H,),   jnp.float32, -k, k),
        "ln_a_g":   jnp.ones((H,), jnp.float32),
        "ln_a_b":   jnp.zeros((H,), jnp.float32),
        "w_actor":  jax.random.uniform(keys[4], (A, H), jnp.float32, -k, k),
        "b_actor":  jax.random.uniform(keys[5], (A,),   jnp.float32, -k, k),
        "ln_c_g":   jnp.ones((H,), jnp.float32),
        "ln_c_b":   jnp.zeros((H,), jnp.float32),
        "w_critic": jax.random.uniform(keys[6], (1, H), jnp.float32, -k, k),
        "b_critic": jax.random.uniform(keys[7], (1,),   jnp.float32, -k, k),
    }

    x = jax.random.normal(keys[8], (B, T, D), jnp.float32)

    prep = prepare_params(params, input_dim=D)          # one-time preprocessing
    policy, value = actor_critic_forward(x, prep)
    jax.block_until_ready((policy, value))

    # sanity: shapes, softmax rows sum to 1, and match the pure-JAX reference
    assert policy.shape == (B, A) and value.shape == (B, 1)
    assert jnp.allclose(jnp.sum(policy, axis=-1), 1.0, atol=1e-5)
    policy_ref, value_ref = _reference_forward(x, params)
    assert jnp.allclose(policy, policy_ref, atol=2e-3, rtol=2e-3)
    assert jnp.allclose(value, value_ref, atol=2e-3, rtol=2e-3)

    print("KERNEL_OK")
</pallas_src>

<mosaic_0001>
module attributes {stable_mosaic.version = 11 : i64} {
  func.func @_actor_critic_kernel(%arg0: memref<16x16xf32, #tpu.memory_space<vmem>>, %arg1: memref<16x384xf32, #tpu.memory_space<vmem>>, %arg2: memref<128x384xf32, #tpu.memory_space<vmem>>, %arg3: memref<2x384xf32, #tpu.memory_space<vmem>>, %arg4: memref<128x128xf32, #tpu.memory_space<vmem>>, %arg5: memref<1x128xf32, #tpu.memory_space<vmem>>, %arg6: memref<2x128xf32, #tpu.memory_space<vmem>>) attributes {dimension_semantics = [], scalar_prefetch = 0 : i64, scratch_operands = 0 : i64, tpu.core_type = #tpu.core_type<tc>} {
    %c0 = arith.constant 0 : index
    %c0_0 = arith.constant 0 : index
    %0 = vector.load %arg0[%c0, %c0_0] : memref<16x16xf32, #tpu.memory_space<vmem>>, vector<16x16xf32>
    %c0_1 = arith.constant 0 : index
    %c0_2 = arith.constant 0 : index
    %1 = vector.load %arg1[%c0_1, %c0_2] : memref<16x384xf32, #tpu.memory_space<vmem>>, vector<16x384xf32>
    %cst = arith.constant dense<0.000000e+00> : vector<16x384xf32>
    %2 = tpu.matmul %0, %1, %cst {dimension_numbers = #tpu.dot_dimension_numbers<[1], [0], [0], [1], [0, 0, 1, 1], [], []>} : vector<16x16xf32>, vector<16x384xf32>, vector<16x384xf32> -> vector<16x384xf32>
    %c0_3 = arith.constant 0 : index
    %c0_4 = arith.constant 0 : index
    %3 = vector.load %arg3[%c0_3, %c0_4] : memref<2x384xf32, #tpu.memory_space<vmem>>, vector<1x384xf32>
    %4 = vector.broadcast %3 : vector<1x384xf32> to vector<16x384xf32>
    %5 = arith.addf %2, %4 : vector<16x384xf32>
    %c0_5 = arith.constant 0 : index
    %c0_6 = arith.constant 0 : index
    %6 = vector.load %arg2[%c0_5, %c0_6] : memref<128x384xf32, #tpu.memory_space<vmem>>, vector<128x384xf32>
    %c1 = arith.constant 1 : index
    %c0_7 = arith.constant 0 : index
    %7 = vector.load %arg3[%c1, %c0_7] : memref<2x384xf32, #tpu.memory_space<vmem>>, vector<1x384xf32>
    %cst_8 = arith.constant 0.000000e+00 : f32
    %8 = vector.broadcast %cst_8 : f32 to vector<2x128xf32>
    %9 = vector.extract_strided_slice %5 {offsets = [0, 0], sizes = [2, 384], strides = [1, 1]} : vector<16x384xf32> to vector<2x384xf32>
    %cst_9 = arith.constant dense<0.000000e+00> : vector<2x384xf32>
    %10 = tpu.matmul %8, %6, %cst_9 {dimension_numbers = #tpu.dot_dimension_numbers<[1], [0], [0], [1], [0, 0, 1, 1], [], []>} : vector<2x128xf32>, vector<128x384xf32>, vector<2x384xf32> -> vector<2x384xf32>
    %11 = vector.broadcast %7 : vector<1x384xf32> to vector<2x384xf32>
    %12 = arith.addf %10, %11 : vector<2x384xf32>
    %13 = vector.extract_strided_slice %9 {offsets = [0, 0], sizes = [2, 128], strides = [1, 1]} : vector<2x384xf32> to vector<2x128xf32>
    %14 = vector.extract_strided_slice %12 {offsets = [0, 0], sizes = [2, 128], strides = [1, 1]} : vector<2x384xf32> to vector<2x128xf32>
    %15 = arith.addf %13, %14 : vector<2x128xf32>
    %16 = arith.negf %15 : vector<2x128xf32>
    %17 = math.exp %16 : vector<2x128xf32>
    %cst_10 = arith.constant 1.000000e+00 : f32
    %18 = vector.broadcast %cst_10 : f32 to vector<2x128xf32>
    %19 = arith.addf %18, %17 : vector<2x128xf32>
    %20 = arith.divf %18, %19 : vector<2x128xf32>
    %21 = vector.extract_strided_slice %9 {offsets = [0, 128], sizes = [2, 128], strides = [1, 1]} : vector<2x384xf32> to vector<2x128xf32>
    %22 = vector.extract_strided_slice %12 {offsets = [0, 128], sizes = [2, 128], strides = [1, 1]} : vector<2x384xf32> to vector<2x128xf32>
    %23 = arith.addf %21, %22 : vector<2x128xf32>
    %24 = arith.negf %23 : vector<2x128xf32>
    %25 = math.exp %24 : vector<2x128xf32>
    %cst_11 = arith.constant 1.000000e+00 : f32
    %26 = vector.broadcast %cst_11 : f32 to vector<2x128xf32>
    %27 = arith.addf %26, %25 : vector<2x128xf32>
    %28 = arith.divf %26, %27 : vector<2x128xf32>
    %29 = vector.extract_strided_slice %9 {offsets = [0, 256], sizes = [2, 128], strides = [1, 1]} : vector<2x384xf32> to vector<2x128xf32>
    %30 = vector.extract_strided_slice %12 {offsets = [0, 256], sizes = [2, 128], strides = [1, 1]} : vector<2x384xf32> to vector<2x128xf32>
    %31 = arith.mulf %20, %30 : vector<2x128xf32>
    %32 = arith.addf %29, %31 : vector<2x128xf32>
    %33 = math.tanh %32 : vector<2x128xf32>
    %cst_12 = arith.constant 1.000000e+00 : f32
    %34 = vector.broadcast %cst_12 : f32 to vector<2x128xf32>
    %35 = arith.subf %34, %28 : vector<2x128xf32>
    %36 = arith.mulf %35, %33 : vector<2x128xf32>
    %37 = arith.mulf %28, %8 : vector<2x128xf32>
    %38 = arith.addf %36, %37 : vector<2x128xf32>
    %39 = vector.extract_strided_slice %5 {offsets = [2, 0], sizes = [2, 384], strides = [1, 1]} : vector<16x384xf32> to vector<2x384xf32>
    %cst_13 = arith.constant dense<0.000000e+00> : vector<2x384xf32>
    %40 = tpu.matmul %38, %6, %cst_13 {dimension_numbers = #tpu.dot_dimension_numbers<[1], [0], [0], [1], [0, 0, 1, 1], [], []>} : vector<2x128xf32>, vector<128x384xf32>, vector<2x384xf32> -> vector<2x384xf32>
    %41 = vector.broadcast %7 : vector<1x384xf32> to vector<2x384xf32>
    %42 = arith.addf %40, %41 : vector<2x384xf32>
    %43 = vector.extract_strided_slice %39 {offsets = [0, 0], sizes = [2, 128], strides = [1, 1]} : vector<2x384xf32> to vector<2x128xf32>
    %44 = vector.extract_strided_slice %42 {offsets = [0, 0], sizes = [2, 128], strides = [1, 1]} : vector<2x384xf32> to vector<2x128xf32>
    %45 = arith.addf %43, %44 : vector<2x128xf32>
    %46 = arith.negf %45 : vector<2x128xf32>
    %47 = math.exp %46 : vector<2x128xf32>
    %cst_14 = arith.constant 1.000000e+00 : f32
    %48 = vector.broadcast %cst_14 : f32 to vector<2x128xf32>
    %49 = arith.addf %48, %47 : vector<2x128xf32>
    %50 = arith.divf %48, %49 : vector<2x128xf32>
    %51 = vector.extract_strided_slice %39 {offsets = [0, 128], sizes = [2, 128], strides = [1, 1]} : vector<2x384xf32> to vector<2x128xf32>
    %52 = vector.extract_strided_slice %42 {offsets = [0, 128], sizes = [2, 128], strides = [1, 1]} : vector<2x384xf32> to vector<2x128xf32>
    %53 = arith.addf %51, %52 : vector<2x128xf32>
    %54 = arith.negf %53 : vector<2x128xf32>
    %55 = math.exp %54 : vector<2x128xf32>
    %cst_15 = arith.constant 1.000000e+00 : f32
    %56 = vector.broadcast %cst_15 : f32 to vector<2x128xf32>
    %57 = arith.addf %56, %55 : vector<2x128xf32>
    %58 = arith.divf %56, %57 : vector<2x128xf32>
    %59 = vector.extract_strided_slice %39 {offsets = [0, 256], sizes = [2, 128], strides = [1, 1]} : vector<2x384xf32> to vector<2x128xf32>
    %60 = vector.extract_strided_slice %42 {offsets = [0, 256], sizes = [2, 128], strides = [1, 1]} : vector<2x384xf32> to vector<2x128xf32>
    %61 = arith.mulf %50, %60 : vector<2x128xf32>
    %62 = arith.addf %59, %61 : vector<2x128xf32>
    %63 = math.tanh %62 : vector<2x128xf32>
    %cst_16 = arith.constant 1.000000e+00 : f32
    %64 = vector.broadcast %cst_16 : f32 to vector<2x128xf32>
    %65 = arith.subf %64, %58 : vector<2x128xf32>
    %66 = arith.mulf %65, %63 : vector<2x128xf32>
    %67 = arith.mulf %58, %38 : vector<2x128xf32>
    %68 = arith.addf %66, %67 : vector<2x128xf32>
    %69 = vector.extract_strided_slice %5 {offsets = [4, 0], sizes = [2, 384], strides = [1, 1]} : vector<16x384xf32> to vector<2x384xf32>
    %cst_17 = arith.constant dense<0.000000e+00> : vector<2x384xf32>
    %70 = tpu.matmul %68, %6, %cst_17 {dimension_numbers = #tpu.dot_dimension_numbers<[1], [0], [0], [1], [0, 0, 1, 1], [], []>} : vector<2x128xf32>, vector<128x384xf32>, vector<2x384xf32> -> vector<2x384xf32>
    %71 = vector.broadcast %7 : vector<1x384xf32> to vector<2x384xf32>
    %72 = arith.addf %70, %71 : vector<2x384xf32>
    %73 = vector.extract_strided_slice %69 {offsets = [0, 0], sizes = [2, 128], strides = [1, 1]} : vector<2x384xf32> to vector<2x128xf32>
    %74 = vector.extract_strided_slice %72 {offsets = [0, 0], sizes = [2, 128], strides = [1, 1]} : vector<2x384xf32> to vector<2x128xf32>
    %75 = arith.addf %73, %74 : vector<2x128xf32>
    %76 = arith.negf %75 : vector<2x128xf32>
    %77 = math.exp %76 : vector<2x128xf32>
    %cst_18 = arith.constant 1.000000e+00 : f32
    %78 = vector.broadcast %cst_18 : f32 to vector<2x128xf32>
    %79 = arith.addf %78, %77 : vector<2x128xf32>
    %80 = arith.divf %78, %79 : vector<2x128xf32>
    %81 = vector.extract_strided_slice %69 {offsets = [0, 128], sizes = [2, 128], strides = [1, 1]} : vector<2x384xf32> to vector<2x128xf32>
    %82 = vector.extract_strided_slice %72 {offsets = [0, 128], sizes = [2, 128], strides = [1, 1]} : vector<2x384xf32> to vector<2x128xf32>
    %83 = arith.addf %81, %82 : vector<2x128xf32>
    %84 = arith.negf %83 : vector<2x128xf32>
    %85 = math.exp %84 : vector<2x128xf32>
    %cst_19 = arith.constant 1.000000e+00 : f32
    %86 = vector.broadcast %cst_19 : f32 to vector<2x128xf32>
    %87 = arith.addf %86, %85 : vector<2x128xf32>
    %88 = arith.divf %86, %87 : vector<2x128xf32>
    %89 = vector.extract_strided_slice %69 {offsets = [0, 256], sizes = [2, 128], strides = [1, 1]} : vector<2x384xf32> to vector<2x128xf32>
    %90 = vector.extract_strided_slice %72 {offsets = [0, 256], sizes = [2, 128], strides = [1, 1]} : vector<2x384xf32> to vector<2x128xf32>
    %91 = arith.mulf %80, %90 : vector<2x128xf32>
    %92 = arith.addf %89, %91 : vector<2x128xf32>
    %93 = math.tanh %92 : vector<2x128xf32>
    %cst_20 = arith.constant 1.000000e+00 : f32
    %94 = vector.broadcast %cst_20 : f32 to vector<2x128xf32>
    %95 = arith.subf %94, %88 : vector<2x128xf32>
    %96 = arith.mulf %95, %93 : vector<2x128xf32>
    %97 = arith.mulf %88, %68 : vector<2x128xf32>
    %98 = arith.addf %96, %97 : vector<2x128xf32>
    %99 = vector.extract_strided_slice %5 {offsets = [6, 0], sizes = [2, 384], strides = [1, 1]} : vector<16x384xf32> to vector<2x384xf32>
    %cst_21 = arith.constant dense<0.000000e+00> : vector<2x384xf32>
    %100 = tpu.matmul %98, %6, %cst_21 {dimension_numbers = #tpu.dot_dimension_numbers<[1], [0], [0], [1], [0, 0, 1, 1], [], []>} : vector<2x128xf32>, vector<128x384xf32>, vector<2x384xf32> -> vector<2x384xf32>
    %101 = vector.broadcast %7 : vector<1x384xf32> to vector<2x384xf32>
    %102 = arith.addf %100, %101 : vector<2x384xf32>
    %103 = vector.extract_strided_slice %99 {offsets = [0, 0], sizes = [2, 128], strides = [1, 1]} : vector<2x384xf32> to vector<2x128xf32>
    %104 = vector.extract_strided_slice %102 {offsets = [0, 0], sizes = [2, 128], strides = [1, 1]} : vector<2x384xf32> to vector<2x128xf32>
    %105 = arith.addf %103, %104 : vector<2x128xf32>
    %106 = arith.negf %105 : vector<2x128xf32>
    %107 = math.exp %106 : vector<2x128xf32>
    %cst_22 = arith.constant 1.000000e+00 : f32
    %108 = vector.broadcast %cst_22 : f32 to vector<2x128xf32>
    %109 = arith.addf %108, %107 : vector<2x128xf32>
    %110 = arith.divf %108, %109 : vector<2x128xf32>
    %111 = vector.extract_strided_slice %99 {offsets = [0, 128], sizes = [2, 128], strides = [1, 1]} : vector<2x384xf32> to vector<2x128xf32>
    %112 = vector.extract_strided_slice %102 {offsets = [0, 128], sizes = [2, 128], strides = [1, 1]} : vector<2x384xf32> to vector<2x128xf32>
    %113 = arith.addf %111, %112 : vector<2x128xf32>
    %114 = arith.negf %113 : vector<2x128xf32>
    %115 = math.exp %114 : vector<2x128xf32>
    %cst_23 = arith.constant 1.000000e+00 : f32
    %116 = vector.broadcast %cst_23 : f32 to vector<2x128xf32>
    %117 = arith.addf %116, %115 : vector<2x128xf32>
    %118 = arith.divf %116, %117 : vector<2x128xf32>
    %119 = vector.extract_strided_slice %99 {offsets = [0, 256], sizes = [2, 128], strides = [1, 1]} : vector<2x384xf32> to vector<2x128xf32>
    %120 = vector.extract_strided_slice %102 {offsets = [0, 256], sizes = [2, 128], strides = [1, 1]} : vector<2x384xf32> to vector<2x128xf32>
    %121 = arith.mulf %110, %120 : vector<2x128xf32>
    %122 = arith.addf %119, %121 : vector<2x128xf32>
    %123 = math.tanh %122 : vector<2x128xf32>
    %cst_24 = arith.constant 1.000000e+00 : f32
    %124 = vector.broadcast %cst_24 : f32 to vector<2x128xf32>
    %125 = arith.subf %124, %118 : vector<2x128xf32>
    %126 = arith.mulf %125, %123 : vector<2x128xf32>
    %127 = arith.mulf %118, %98 : vector<2x128xf32>
    %128 = arith.addf %126, %127 : vector<2x128xf32>
    %129 = vector.extract_strided_slice %5 {offsets = [8, 0], sizes = [2, 384], strides = [1, 1]} : vector<16x384xf32> to vector<2x384xf32>
    %cst_25 = arith.constant dense<0.000000e+00> : vector<2x384xf32>
    %130 = tpu.matmul %128, %6, %cst_25 {dimension_numbers = #tpu.dot_dimension_numbers<[1], [0], [0], [1], [0, 0, 1, 1], [], []>} : vector<2x128xf32>, vector<128x384xf32>, vector<2x384xf32> -> vector<2x384xf32>
    %131 = vector.broadcast %7 : vector<1x384xf32> to vector<2x384xf32>
    %132 = arith.addf %130, %131 : vector<2x384xf32>
    %133 = vector.extract_strided_slice %129 {offsets = [0, 0], sizes = [2, 128], strides = [1, 1]} : vector<2x384xf32> to vector<2x128xf32>
    %134 = vector.extract_strided_slice %132 {offsets = [0, 0], sizes = [2, 128], strides = [1, 1]} : vector<2x384xf32> to vector<2x128xf32>
    %135 = arith.addf %133, %134 : vector<2x128xf32>
    %136 = arith.negf %135 : vector<2x128xf32>
    %137 = math.exp %136 : vector<2x128xf32>
    %cst_26 = arith.constant 1.000000e+00 : f32
    %138 = vector.broadcast %cst_26 : f32 to vector<2x128xf32>
    %139 = arith.addf %138, %137 : vector<2x128xf32>
    %140 = arith.divf %138, %139 : vector<2x128xf32>
    %141 = vector.extract_strided_slice %129 {offsets = [0, 128], sizes = [2, 128], strides = [1, 1]} : vector<2x384xf32> to vector<2x128xf32>
    %142 = vector.extract_strided_slice %132 {offsets = [0, 128], sizes = [2, 128], strides = [1, 1]} : vector<2x384xf32> to vector<2x128xf32>
    %143 = arith.addf %141, %142 : vector<2x128xf32>
    %144 = arith.negf %143 : vector<2x128xf32>
    %145 = math.exp %144 : vector<2x128xf32>
    %cst_27 = arith.constant 1.000000e+00 : f32
    %146 = vector.broadcast %cst_27 : f32 to vector<2x128xf32>
    %147 = arith.addf %146, %145 : vector<2x128xf32>
    %148 = arith.divf %146, %147 : vector<2x128xf32>
    %149 = vector.extract_strided_slice %129 {offsets = [0, 256], sizes = [2, 128], strides = [1, 1]} : vector<2x384xf32> to vector<2x128xf32>
    %150 = vector.extract_strided_slice %132 {offsets = [0, 256], sizes = [2, 128], strides = [1, 1]} : vector<2x384xf32> to vector<2x128xf32>
    %151 = arith.mulf %140, %150 : vector<2x128xf32>
    %152 = arith.addf %149, %151 : vector<2x128xf32>
    %153 = math.tanh %152 : vector<2x128xf32>
    %cst_28 = arith.constant 1.000000e+00 : f32
    %154 = vector.broadcast %cst_28 : f32 to vector<2x128xf32>
    %155 = arith.subf %154, %148 : vector<2x128xf32>
    %156 = arith.mulf %155, %153 : vector<2x128xf32>
    %157 = arith.mulf %148, %128 : vector<2x128xf32>
    %158 = arith.addf %156, %157 : vector<2x128xf32>
    %159 = vector.extract_strided_slice %5 {offsets = [10, 0], sizes = [2, 384], strides = [1, 1]} : vector<16x384xf32> to vector<2x384xf32>
    %cst_29 = arith.constant dense<0.000000e+00> : vector<2x384xf32>
    %160 = tpu.matmul %158, %6, %cst_29 {dimension_numbers = #tpu.dot_dimension_numbers<[1], [0], [0], [1], [0, 0, 1, 1], [], []>} : vector<2x128xf32>, vector<128x384xf32>, vector<2x384xf32> -> vector<2x384xf32>
    %161 = vector.broadcast %7 : vector<1x384xf32> to vector<2x384xf32>
    %162 = arith.addf %160, %161 : vector<2x384xf32>
    %163 = vector.extract_strided_slice %159 {offsets = [0, 0], sizes = [2, 128], strides = [1, 1]} : vector<2x384xf32> to vector<2x128xf32>
    %164 = vector.extract_strided_slice %162 {offsets = [0, 0], sizes = [2, 128], strides = [1, 1]} : vector<2x384xf32> to vector<2x128xf32>
    %165 = arith.addf %163, %164 : vector<2x128xf32>
    %166 = arith.negf %165 : vector<2x128xf32>
    %167 = math.exp %166 : vector<2x128xf32>
    %cst_30 = arith.constant 1.000000e+00 : f32
    %168 = vector.broadcast %cst_30 : f32 to vector<2x128xf32>
    %169 = arith.addf %168, %167 : vector<2x128xf32>
    %170 = arith.divf %168, %169 : vector<2x128xf32>
    %171 = vector.extract_strided_slice %159 {offsets = [0, 128], sizes = [2, 128], strides = [1, 1]} : vector<2x384xf32> to vector<2x128xf32>
    %172 = vector.extract_strided_slice %162 {offsets = [0, 128], sizes = [2, 128], strides = [1, 1]} : vector<2x384xf32> to vector<2x128xf32>
    %173 = arith.addf %171, %172 : vector<2x128xf32>
    %174 = arith.negf %173 : vector<2x128xf32>
    %175 = math.exp %174 : vector<2x128xf32>
    %cst_31 = arith.constant 1.000000e+00 : f32
    %176 = vector.broadcast %cst_31 : f32 to vector<2x128xf32>
    %177 = arith.addf %176, %175 : vector<2x128xf32>
    %178 = arith.divf %176, %177 : vector<2x128xf32>
    %179 = vector.extract_strided_slice %159 {offsets = [0, 256], sizes = [2, 128], strides = [1, 1]} : vector<2x384xf32> to vector<2x128xf32>
    %180 = vector.extract_strided_slice %162 {offsets = [0, 256], sizes = [2, 128], strides = [1, 1]} : vector<2x384xf32> to vector<2x128xf32>
    %181 = arith.mulf %170, %180 : vector<2x128xf32>
    %182 = arith.addf %179, %181 : vector<2x128xf32>
    %183 = math.tanh %182 : vector<2x128xf32>
    %cst_32 = arith.constant 1.000000e+00 : f32
    %184 = vector.broadcast %cst_32 : f32 to vector<2x128xf32>
    %185 = arith.subf %184, %178 : vector<2x128xf32>
    %186 = arith.mulf %185, %183 : vector<2x128xf32>
    %187 = arith.mulf %178, %158 : vector<2x128xf32>
    %188 = arith.addf %186, %187 : vector<2x128xf32>
    %189 = vector.extract_strided_slice %5 {offsets = [12, 0], sizes = [2, 384], strides = [1, 1]} : vector<16x384xf32> to vector<2x384xf32>
    %cst_33 = arith.constant dense<0.000000e+00> : vector<2x384xf32>
    %190 = tpu.matmul %188, %6, %cst_33 {dimension_numbers = #tpu.dot_dimension_numbers<[1], [0], [0], [1], [0, 0, 1, 1], [], []>} : vector<2x128xf32>, vector<128x384xf32>, vector<2x384xf32> -> vector<2x384xf32>
    %191 = vector.broadcast %7 : vector<1x384xf32> to vector<2x384xf32>
    %192 = arith.addf %190, %191 : vector<2x384xf32>
    %193 = vector.extract_strided_slice %189 {offsets = [0, 0], sizes = [2, 128], strides = [1, 1]} : vector<2x384xf32> to vector<2x128xf32>
    %194 = vector.extract_strided_slice %192 {offsets = [0, 0], sizes = [2, 128], strides = [1, 1]} : vector<2x384xf32> to vector<2x128xf32>
    %195 = arith.addf %193, %194 : vector<2x128xf32>
    %196 = arith.negf %195 : vector<2x128xf32>
    %197 = math.exp %196 : vector<2x128xf32>
    %cst_34 = arith.constant 1.000000e+00 : f32
    %198 = vector.broadcast %cst_34 : f32 to vector<2x128xf32>
    %199 = arith.addf %198, %197 : vector<2x128xf32>
    %200 = arith.divf %198, %199 : vector<2x128xf32>
    %201 = vector.extract_strided_slice %189 {offsets = [0, 128], sizes = [2, 128], strides = [1, 1]} : vector<2x384xf32> to vector<2x128xf32>
    %202 = vector.extract_strided_slice %192 {offsets = [0, 128], sizes = [2, 128], strides = [1, 1]} : vector<2x384xf32> to vector<2x128xf32>
    %203 = arith.addf %201, %202 : vector<2x128xf32>
    %204 = arith.negf %203 : vector<2x128xf32>
    %205 = math.exp %204 : vector<2x128xf32>
    %cst_35 = arith.constant 1.000000e+00 : f32
    %206 = vector.broadcast %cst_35 : f32 to vector<2x128xf32>
    %207 = arith.addf %206, %205 : vector<2x128xf32>
    %208 = arith.divf %206, %207 : vector<2x128xf32>
    %209 = vector.extract_strided_slice %189 {offsets = [0, 256], sizes = [2, 128], strides = [1, 1]} : vector<2x384xf32> to vector<2x128xf32>
    %210 = vector.extract_strided_slice %192 {offsets = [0, 256], sizes = [2, 128], strides = [1, 1]} : vector<2x384xf32> to vector<2x128xf32>
    %211 = arith.mulf %200, %210 : vector<2x128xf32>
    %212 = arith.addf %209, %211 : vector<2x128xf32>
    %213 = math.tanh %212 : vector<2x128xf32>
    %cst_36 = arith.constant 1.000000e+00 : f32
    %214 = vector.broadcast %cst_36 : f32 to vector<2x128xf32>
    %215 = arith.subf %214, %208 : vector<2x128xf32>
    %216 = arith.mulf %215, %213 : vector<2x128xf32>
    %217 = arith.mulf %208, %188 : vector<2x128xf32>
    %218 = arith.addf %216, %217 : vector<2x128xf32>
    %219 = vector.extract_strided_slice %5 {offsets = [14, 0], sizes = [2, 384], strides = [1, 1]} : vector<16x384xf32> to vector<2x384xf32>
    %cst_37 = arith.constant dense<0.000000e+00> : vector<2x384xf32>
    %220 = tpu.matmul %218, %6, %cst_37 {dimension_numbers = #tpu.dot_dimension_numbers<[1], [0], [0], [1], [0, 0, 1, 1], [], []>} : vector<2x128xf32>, vector<128x384xf32>, vector<2x384xf32> -> vector<2x384xf32>
    %221 = vector.broadcast %7 : vector<1x384xf32> to vector<2x384xf32>
    %222 = arith.addf %220, %221 : vector<2x384xf32>
    %223 = vector.extract_strided_slice %219 {offsets = [0, 0], sizes = [2, 128], strides = [1, 1]} : vector<2x384xf32> to vector<2x128xf32>
    %224 = vector.extract_strided_slice %222 {offsets = [0, 0], sizes = [2, 128], strides = [1, 1]} : vector<2x384xf32> to vector<2x128xf32>
    %225 = arith.addf %223, %224 : vector<2x128xf32>
    %226 = arith.negf %225 : vector<2x128xf32>
    %227 = math.exp %226 : vector<2x128xf32>
    %cst_38 = arith.constant 1.000000e+00 : f32
    %228 = vector.broadcast %cst_38 : f32 to vector<2x128xf32>
    %229 = arith.addf %228, %227 : vector<2x128xf32>
    %230 = arith.divf %228, %229 : vector<2x128xf32>
    %231 = vector.extract_strided_slice %219 {offsets = [0, 128], sizes = [2, 128], strides = [1, 1]} : vector<2x384xf32> to vector<2x128xf32>
    %232 = vector.extract_strided_slice %222 {offsets = [0, 128], sizes = [2, 128], strides = [1, 1]} : vector<2x384xf32> to vector<2x128xf32>
    %233 = arith.addf %231, %232 : vector<2x128xf32>
    %234 = arith.negf %233 : vector<2x128xf32>
    %235 = math.exp %234 : vector<2x128xf32>
    %cst_39 = arith.constant 1.000000e+00 : f32
    %236 = vector.broadcast %cst_39 : f32 to vector<2x128xf32>
    %237 = arith.addf %236, %235 : vector<2x128xf32>
    %238 = arith.divf %236, %237 : vector<2x128xf32>
    %239 = vector.extract_strided_slice %219 {offsets = [0, 256], sizes = [2, 128], strides = [1, 1]} : vector<2x384xf32> to vector<2x128xf32>
    %240 = vector.extract_strided_slice %222 {offsets = [0, 256], sizes = [2, 128], strides = [1, 1]} : vector<2x384xf32> to vector<2x128xf32>
    %241 = arith.mulf %230, %240 : vector<2x128xf32>
    %242 = arith.addf %239, %241 : vector<2x128xf32>
    %243 = math.tanh %242 : vector<2x128xf32>
    %cst_40 = arith.constant 1.000000e+00 : f32
    %244 = vector.broadcast %cst_40 : f32 to vector<2x128xf32>
    %245 = arith.subf %244, %238 : vector<2x128xf32>
    %246 = arith.mulf %245, %243 : vector<2x128xf32>
    %247 = arith.mulf %238, %218 : vector<2x128xf32>
    %248 = arith.addf %246, %247 : vector<2x128xf32>
    %249 = tpu.iota {dimensions = array<i32: 1>} : vector<2x128xi32>
    %cst_41 = arith.constant dense<0.000000e+00> : vector<2xf32>
    %250 = vector.multi_reduction <add>, %248, %cst_41 [1] : vector<2x128xf32> to vector<2xf32>
    %251 = vector.shape_cast %250 : vector<2xf32> to vector<2x1xf32>
    %cst_42 = arith.constant 3.125000e-02 : f32
    %252 = vector.broadcast %cst_42 : f32 to vector<2x1xf32>
    %253 = arith.mulf %251, %252 : vector<2x1xf32>
    %c32_i32 = arith.constant 32 : i32
    %254 = vector.broadcast %c32_i32 : i32 to vector<2x128xi32>
    %255 = arith.cmpi slt, %249, %254 : vector<2x128xi32>
    %256 = vector.broadcast %253 : vector<2x1xf32> to vector<2x128xf32>
    %257 = arith.subf %248, %256 : vector<2x128xf32>
    %cst_43 = arith.constant 0.000000e+00 : f32
    %258 = vector.broadcast %cst_43 : f32 to vector<2x128xf32>
    %259 = arith.select %255, %257, %258 : vector<2x128xi1>, vector<2x128xf32>
    %260 = arith.mulf %259, %259 : vector<2x128xf32>
    %cst_44 = arith.constant dense<0.000000e+00> : vector<2xf32>
    %261 = vector.multi_reduction <add>, %260, %cst_44 [1] : vector<2x128xf32> to vector<2xf32>
    %262 = vector.shape_cast %261 : vector<2xf32> to vector<2x1xf32>
    %cst_45 = arith.constant 3.125000e-02 : f32
    %263 = vector.broadcast %cst_45 : f32 to vector<2x1xf32>
    %264 = arith.mulf %262, %263 : vector<2x1xf32>
    %cst_46 = arith.constant 9.99999974E-6 : f32
    %265 = vector.broadcast %cst_46 : f32 to vector<2x1xf32>
    %266 = arith.addf %264, %265 : vector<2x1xf32>
    %267 = math.rsqrt %266 : vector<2x1xf32>
    %268 = vector.broadcast %267 : vector<2x1xf32> to vector<2x128xf32>
    %269 = arith.mulf %259, %268 : vector<2x128xf32>
    %c0_47 = arith.constant 0 : index
    %c0_48 = arith.constant 0 : index
    %270 = vector.load %arg4[%c0_47, %c0_48] : memref<128x128xf32, #tpu.memory_space<vmem>>, vector<128x128xf32>
    %cst_49 = arith.constant dense<0.000000e+00> : vector<2x128xf32>
    %271 = tpu.matmul %269, %270, %cst_49 {dimension_numbers = #tpu.dot_dimension_numbers<[1], [0], [0], [1], [0, 0, 1, 1], [], []>} : vector<2x128xf32>, vector<128x128xf32>, vector<2x128xf32> -> vector<2x128xf32>
    %c0_50 = arith.constant 0 : index
    %c0_51 = arith.constant 0 : index
    %272 = vector.load %arg5[%c0_50, %c0_51] : memref<1x128xf32, #tpu.memory_space<vmem>>, vector<1x128xf32>
    %273 = vector.broadcast %272 : vector<1x128xf32> to vector<2x128xf32>
    %274 = arith.addf %271, %273 : vector<2x128xf32>
    %275 = tpu.iota {dimensions = array<i32: 1>} : vector<2x128xi32>
    %c4_i32 = arith.constant 4 : i32
    %276 = vector.broadcast %c4_i32 : i32 to vector<2x128xi32>
    %277 = arith.cmpi slt, %275, %276 : vector<2x128xi32>
    %cst_52 = arith.constant -1.000000e+30 : f32
    %278 = vector.broadcast %cst_52 : f32 to vector<2x128xf32>
    %279 = arith.select %277, %274, %278 : vector<2x128xi1>, vector<2x128xf32>
    %cst_53 = arith.constant dense<0xFF800000> : vector<2xf32>
    %280 = vector.multi_reduction <maximumf>, %279, %cst_53 [1] : vector<2x128xf32> to vector<2xf32>
    %281 = vector.shape_cast %280 : vector<2xf32> to vector<2x1xf32>
    %282 = vector.broadcast %281 : vector<2x1xf32> to vector<2x128xf32>
    %283 = arith.subf %279, %282 : vector<2x128xf32>
    %284 = math.exp %283 : vector<2x128xf32>
    %cst_54 = arith.constant dense<0.000000e+00> : vector<2xf32>
    %285 = vector.multi_reduction <add>, %284, %cst_54 [1] : vector<2x128xf32> to vector<2xf32>
    %286 = vector.shape_cast %285 : vector<2xf32> to vector<2x1xf32>
    %287 = vector.broadcast %286 : vector<2x1xf32> to vector<2x128xf32>
    %288 = arith.divf %284, %287 : vector<2x128xf32>
    %c4_i32_55 = arith.constant 4 : i32
    %289 = vector.broadcast %c4_i32_55 : i32 to vector<2x128xi32>
    %290 = arith.cmpi eq, %275, %289 : vector<2x128xi32>
    %291 = arith.select %290, %274, %288 : vector<2x128xi1>, vector<2x128xf32>
    %c0_56 = arith.constant 0 : index
    %c0_57 = arith.constant 0 : index
    %292 = vector.load %arg6[%c0_56, %c0_57] : memref<2x128xf32, #tpu.memory_space<vmem>>, vector<2x128xf32>
    tpu.vector_store %arg6[%c0_56, %c0_57], %291 {strides = array<i32>} : memref<2x128xf32, #tpu.memory_space<vmem>>, vector<2x128xf32>,
    return
  }
}

</mosaic_0001>

<llo_original>
// kernel: tpu_custom_call.1
$region0: #{tpu_custom_call.1}
  #allocation0 [shape = 'u32[]', space=smem, size = 0x4, offset = 0x4, fixed_abs, tag = 'smem constant byte address 0x4 - core index']
  #allocation1 [shape = 'u32[144,128]{1,0:T(1,128)}', space=vmem, size = 0x12000, scoped, tag = 'internal scratch']
  %s0 = inlined_call_operand.hbm [shape: f32[16,16], index: 0, kind: input, shape index: {}]
  %s1 = inlined_call_operand.hbm [shape: f32[16,384], index: 1, kind: input, shape index: {}]
  %s2 = inlined_call_operand.hbm [shape: f32[128,384], index: 2, kind: input, shape index: {}]
  %s3 = inlined_call_operand.hbm [shape: f32[2,384], index: 3, kind: input, shape index: {}]
  %s4 = inlined_call_operand.hbm [shape: f32[128,128], index: 4, kind: input, shape index: {}]
  %s5 = inlined_call_operand.vmem [shape: f32[1,128], index: 5, kind: input, shape index: {}]
  %s6 = inlined_call_operand.hbm [shape: f32[2,128], index: 6, kind: output, shape index: {}]
  %s7 = sld [smem:[#allocation0]]
  $region54: #{tpu_custom_call.1} parent=0
    _
  %s9 = ssub.s32 1, %s7
  %s10 = scalar_select 0, %s9, %s7
  $region1: #{tpu_custom_call.1} parent=0
    #allocation2 [shape = 'u8[8192]{0}', space=vmem, size = 0x2000, scoped, tag = 'input window, operand 0, single buffered']
    #allocation3 [shape = 's32[1]{0}', space=sflag, size = 0x4, scoped, tag = 'scoped memory for tpu_custom_call.1']
    #allocation4 [shape = 's32[1]{0}', space=sflag, size = 0x4, scoped, tag = 'scoped memory for tpu_custom_call.1']
    #allocation5 [shape = 'u8[24576]{0}', space=vmem, size = 0x6000, scoped, tag = 'input window, operand 1, single buffered']
    #allocation6 [shape = 's32[1]{0}', space=sflag, size = 0x4, scoped, tag = 'scoped memory for tpu_custom_call.1']
    #allocation7 [shape = 'u8[196608]{0}', space=vmem, size = 0x30000, scoped, tag = 'input window, operand 2, single buffered']
    #allocation8 [shape = 'u8[3072]{0}', space=vmem, size = 0xc00, scoped, tag = 'input window, operand 3, single buffered']
    #allocation9 [shape = 's32[1]{0}', space=sflag, size = 0x4, scoped, tag = 'scoped memory for tpu_custom_call.1']
    #allocation10 [shape = 'u8[65536]{0}', space=vmem, size = 0x10000, scoped, tag = 'input window, operand 4, single buffered']
    #allocation11 [shape = 'u8[1024]{0}', space=vmem, size = 0x400, scoped, tag = 'output window, operand 0, single buffered']
    %11 = vsyncpa [#allocation3], 0
    %12 = vsyncpa [#allocation6], 0
    %13 = vsyncpa [#allocation9], 0
    %14 = vsyncpa [#allocation4], 0
    // Predicated region
    $region2: #{tpu_custom_call.1} parent=1 // pred_check
      _
    $region3: #{tpu_custom_call.1} parent=1 // pred_check_branch
      %16 = sbr.rel (0) target = $region5
    $region4: #{tpu_custom_call.1} parent=1 // pred_region
      %s18 = ssub.s32 256, 256
      %19 = vsyncadd [#allocation3], %s18
      %s20 = sshll.u32 [#allocation2], 4
      %s21 = int_to_ptr.vmem [resolvable:$true] %s20
      %26 = dma.hbm_to_vmem [thread:$0]  %s0, 256, %s21, [#allocation3], 128, 128, 8
    $region5: #{tpu_custom_call.1} parent=1 // pred_fallthru
      _
    // Predicated region
    $region6: #{tpu_custom_call.1} parent=1 // pred_check
      _
    $region7: #{tpu_custom_call.1} parent=1 // pred_check_branch
      %28 = sbr.rel (0) target = $region9
    $region8: #{tpu_custom_call.1} parent=1 // pred_region
      %s30 = ssub.s32 768, 768
      %31 = vsyncadd [#allocation6], %s30
      %s32 = sshll.u32 [#allocation5], 4
      %s33 = int_to_ptr.vmem [resolvable:$true] %s32
      %38 = dma.hbm_to_vmem [thread:$0]  %s1, 768, %s33, [#allocation6], 384, 384, 24
    $region9: #{tpu_custom_call.1} parent=1 // pred_fallthru
      _
    // Predicated region
    $region10: #{tpu_custom_call.1} parent=1 // pred_check
      _
    $region11: #{tpu_custom_call.1} parent=1 // pred_check_branch
      %40 = sbr.rel (0) target = $region13
    $region12: #{tpu_custom_call.1} parent=1 // pred_region
      %s42 = ssub.s32 6144, 6144
      %43 = vsyncadd [#allocation6], %s42
      %s44 = sshll.u32 [#allocation7], 4
      %s45 = int_to_ptr.vmem [resolvable:$true] %s44
      %50 = dma.hbm_to_vmem [thread:$0]  %s2, 6144, %s45, [#allocation6], 384, 384, 24
    $region13: #{tpu_custom_call.1} parent=1 // pred_fallthru
      _
    // Predicated region
    $region14: #{tpu_custom_call.1} parent=1 // pred_check
      _
    $region15: #{tpu_custom_call.1} parent=1 // pred_check_branch
      %52 = sbr.rel (0) target = $region17
    $region16: #{tpu_custom_call.1} parent=1 // pred_region
      %s54 = ssub.s32 96, 96
      %55 = vsyncadd [#allocation9], %s54
      %s57 = sshll.u32 [#allocation8], 4
      %s58 = int_to_ptr.vmem [resolvable:$true] %s57
      %60 = dma.hbm_to_vmem [thread:$0]  %s3, 96, %s58, [#allocation9]
    $region17: #{tpu_custom_call.1} parent=1 // pred_fallthru
      _
    // Predicated region
    $region18: #{tpu_custom_call.1} parent=1 // pred_check
      _
    $region19: #{tpu_custom_call.1} parent=1 // pred_check_branch
      %62 = sbr.rel (0) target = $region21
    $region20: #{tpu_custom_call.1} parent=1 // pred_region
      %s64 = ssub.s32 2048, 2048
      %65 = vsyncadd [#allocation9], %s64
      %s66 = sshll.u32 [#allocation10], 4
      %s67 = int_to_ptr.vmem [resolvable:$true] %s66
      %72 = dma.hbm_to_vmem [thread:$0]  %s4, 2048, %s67, [#allocation9], 128, 128, 8
    $region21: #{tpu_custom_call.1} parent=1 // pred_fallthru
      _
    // Predicated region
    $region22: #{tpu_custom_call.1} parent=1 // pred_check
      _
    $region23: #{tpu_custom_call.1} parent=1 // pred_check_branch
      %74 = sbr.rel (0) target = $region25
    $region24: #{tpu_custom_call.1} parent=1 // pred_region
      _
    $region25: #{tpu_custom_call.1} parent=1 // pred_fallthru
      _
    // Predicated region
    $region26: #{tpu_custom_call.1} parent=1 // pred_check
      _
    $region27: #{tpu_custom_call.1} parent=1 // pred_check_branch
      %76 = sbr.rel (0) target = $region29
    $region28: #{tpu_custom_call.1} parent=1 // pred_region
      %77 = dma.done [#allocation3], 256
    $region29: #{tpu_custom_call.1} parent=1 // pred_fallthru
      _
    // Predicated region
    $region30: #{tpu_custom_call.1} parent=1 // pred_check
      _
    $region31: #{tpu_custom_call.1} parent=1 // pred_check_branch
      %79 = sbr.rel (0) target = $region33
    $region32: #{tpu_custom_call.1} parent=1 // pred_region
      %80 = dma.done [#allocation6], 768
    $region33: #{tpu_custom_call.1} parent=1 // pred_fallthru
      _
    // Predicated region
    $region34: #{tpu_custom_call.1} parent=1 // pred_check
      _
    $region35: #{tpu_custom_call.1} parent=1 // pred_check_branch
      %82 = sbr.rel (0) target = $region37
    $region36: #{tpu_custom_call.1} parent=1 // pred_region
      %83 = dma.done [#allocation6], 6144
    $region37: #{tpu_custom_call.1} parent=1 // pred_fallthru
      _
    // Predicated region
    $region38: #{tpu_custom_call.1} parent=1 // pred_check
      _
    $region39: #{tpu_custom_call.1} parent=1 // pred_check_branch
      %85 = sbr.rel (0) target = $region41
    $region40: #{tpu_custom_call.1} parent=1 // pred_region
      %86 = dma.done [#allocation9], 96
    $region41: #{tpu_custom_call.1} parent=1 // pred_fallthru
      _
    // Predicated region
    $region42: #{tpu_custom_call.1} parent=1 // pred_check
      _
    $region43: #{tpu_custom_call.1} parent=1 // pred_check_branch
      %88 = sbr.rel (0) target = $region45
    $region44: #{tpu_custom_call.1} parent=1 // pred_region
      %89 = dma.done [#allocation9], 2048
    $region45: #{tpu_custom_call.1} parent=1 // pred_fallthru
      _
    %v90 = vld [vmem:[#allocation2] sm:$0xff]
    %v91 = vld [vmem:[#allocation2 + $0x8] sm:$0xff]
    %v92 = vld [vmem:[#allocation5] sm:$0xff]
    %v93 = vld [vmem:[#allocation5 + $0x8] sm:$0xff]
    %v94 = vld [vmem:[#allocation5 + $0x10] sm:$0xff]
    %v95 = vld [vmem:[#allocation5 + $0x18] sm:$0xff]
    %v96 = vld [vmem:[#allocation5 + $0x20] sm:$0xff]
    %v97 = vld [vmem:[#allocation5 + $0x28] sm:$0xff]
    %v98 = vld [vmem:[#allocation8] ss:$2 sm:$0x7]
    %v100 = vlaneseq
    %v101 = vshrl.u32 %v100, 7
    %v102 = vsub.s32 0, %v101
    %v103 = vrot.slane %v98, %v102
    %v104 = vlaneseq
    %v105 = vshrl.u32 %v104, 7
    %v106 = vsub.s32 1, %v105
    %v107 = vrot.slane %v98, %v106
    %v108 = vlaneseq
    %v109 = vshrl.u32 %v108, 7
    %v110 = vsub.s32 2, %v109
    %v111 = vrot.slane %v98, %v110
    %vm115 = vcmask 130048
    %v117 = vsel %vm115, %v90, 0
    %v120 = vsel %vm115, %v91, 0
    %122 = vmatprep.subr.mxu0 0.0
    %123 = vmatpush1.msra.mxu0 0.0
    %124 = vmatprep.subr.mxu0 0.0
    %125 = vmatpush1.msra.mxu0 0.0
    %126 = vmatprep.subr.mxu0 0.0
    %127 = vmatpush1.msra.mxu0 0.0
    %128 = vmatprep.subr.mxu0 0.0
    %129 = vmatpush1.msra.mxu0 0.0
    %130 = vmatprep.subr.mxu0 0.0
    %131 = vmatpush1.msra.mxu0 0.0
    %132 = vmatprep.subr.mxu0 0.0
    %133 = vmatpush1.msra.mxu0 0.0
    %134 = vmatprep.subr.mxu0 0.0
    %135 = vmatpush1.msra.mxu0 0.0
    %136 = vmatprep.subr.mxu0 0.0
    %137 = vmatpush1.msra.mxu0 0.0
    %138 = vmatprep.subr.mxu0 0.0
    %139 = vmatpush1.msra.mxu0 0.0
    %140 = vmatprep.subr.mxu0 0.0
    %141 = vmatpush1.msra.mxu0 0.0
    %142 = vmatprep.subr.mxu0 0.0
    %143 = vmatpush1.msra.mxu0 0.0
    %144 = vmatprep.subr.mxu0 0.0
    %145 = vmatpush1.msra.mxu0 0.0
    %146 = vmatprep.subr.mxu0 0.0
    %147 = vmatpush1.msra.mxu0 0.0
    %148 = vmatprep.subr.mxu0 0.0
    %149 = vmatpush1.msra.mxu0 0.0
    %150 = vmatprep.subr.mxu0 %v96
    %151 = vmatpush1.msra.mxu0 %v95
    %152 = vmatprep.subr.mxu0 %v93
    %153 = vmatpush1.msra.mxu0 %v92
    %154 = vmatprep.subr.mxu0 0.0
    %155 = vmatpush2.msra.mxu0 0.0
    %156 = vmatprep.subr.mxu0 0.0
    %157 = vmatpush2.msra.mxu0 0.0
    %158 = vmatprep.subr.mxu0 0.0
    %159 = vmatpush2.msra.mxu0 0.0
    %160 = vmatprep.subr.mxu0 0.0
    %161 = vmatpush2.msra.mxu0 0.0
    %162 = vmatprep.subr.mxu0 0.0
    %163 = vmatpush2.msra.mxu0 0.0
    %164 = vmatprep.subr.mxu0 0.0
    %165 = vmatpush2.msra.mxu0 0.0
    %166 = vmatprep.subr.mxu0 0.0
    %167 = vmatpush2.msra.mxu0 0.0
    %168 = vmatprep.subr.mxu0 0.0
    %169 = vmatpush2.msra.mxu0 0.0
    %170 = vmatprep.subr.mxu0 0.0
    %171 = vmatpush2.msra.mxu0 0.0
    %172 = vmatprep.subr.mxu0 0.0
    %173 = vmatpush2.msra.mxu0 0.0
    %174 = vmatprep.subr.mxu0 0.0
    %175 = vmatpush2.msra.mxu0 0.0
    %176 = vmatprep.subr.mxu0 0.0
    %177 = vmatpush2.msra.mxu0 0.0
    %178 = vmatprep.subr.mxu0 0.0
    %179 = vmatpush2.msra.mxu0 0.0
    %180 = vmatprep.subr.mxu0 0.0
    %181 = vmatpush2.msra.mxu0 0.0
    %182 = vmatprep.subr.mxu0 0.0
    %183 = vmatpush2.msra.mxu0 0.0
    %184 = vmatprep.subr.mxu0 0.0
    %185 = vmatpush2.msra.mxu0 0.0
    %186 = vmatprep.mubr.f32.mxu0 0.0
    %187 = vmatmul.mubr.f32.gmra.mxu0 %v117
    %v188 = vpop.f32.mrf.mxu0
    %v189 = vadd.f32 %v103, %v188
    %v190 = vpop.f32.mrf.mxu0
    %v191 = vadd.f32 %v107, %v190
    %192 = vmatprep.mubr.f32.mxu0 0.0
    %193 = vmatmul.mubr.f32.gmra.mxu0 %v120
    %v194 = vpop.f32.mrf.mxu0
    %v195 = vadd.f32 %v103, %v194
    %v196 = vpop.f32.mrf.mxu0
    %v197 = vadd.f32 %v107, %v196
    %198 = vdwg.mxu0
    %199 = vmatprep.subr.mxu0 0.0
    %200 = vmatpush1.msra.mxu0 0.0
    %201 = vmatprep.subr.mxu0 0.0
    %202 = vmatpush1.msra.mxu0 0.0
    %203 = vmatprep.subr.mxu0 0.0
    %204 = vmatpush1.msra.mxu0 0.0
    %205 = vmatprep.subr.mxu0 0.0
    %206 = vmatpush1.msra.mxu0 0.0
    %207 = vmatprep.subr.mxu0 0.0
    %208 = vmatpush1.msra.mxu0 0.0
    %209 = vmatprep.subr.mxu0 0.0
    %210 = vmatpush1.msra.mxu0 0.0
    %211 = vmatprep.subr.mxu0 0.0
    %212 = vmatpush1.msra.mxu0 0.0
    %213 = vmatprep.subr.mxu0 0.0
    %214 = vmatpush1.msra.mxu0 0.0
    %215 = vmatprep.subr.mxu0 0.0
    %216 = vmatpush1.msra.mxu0 0.0
    %217 = vmatprep.subr.mxu0 0.0
    %218 = vmatpush1.msra.mxu0 0.0
    %219 = vmatprep.subr.mxu0 0.0
    %220 = vmatpush1.msra.mxu0 0.0
    %221 = vmatprep.subr.mxu0 0.0
    %222 = vmatpush1.msra.mxu0 0.0
    %223 = vmatprep.subr.mxu0 0.0
    %224 = vmatpush1.msra.mxu0 0.0
    %225 = vmatprep.subr.mxu0 0.0
    %226 = vmatpush1.msra.mxu0 0.0
    %227 = vmatprep.subr.mxu0 0.0
    %228 = vmatpush1.msra.mxu0 %v97
    %229 = vmatprep.subr.mxu0 0.0
    %230 = vmatpush1.msra.mxu0 %v94
    %231 = vmatprep.subr.mxu0 0.0
    %232 = vmatpush2.msra.mxu0 0.0
    %233 = vmatprep.subr.mxu0 0.0
    %234 = vmatpush2.msra.mxu0 0.0
    %235 = vmatprep.subr.mxu0 0.0
    %236 = vmatpush2.msra.mxu0 0.0
    %237 = vmatprep.subr.mxu0 0.0
    %238 = vmatpush2.msra.mxu0 0.0
    %239 = vmatprep.subr.mxu0 0.0
    %240 = vmatpush2.msra.mxu0 0.0
    %241 = vmatprep.subr.mxu0 0.0
    %242 = vmatpush2.msra.mxu0 0.0
    %243 = vmatprep.subr.mxu0 0.0
    %244 = vmatpush2.msra.mxu0 0.0
    %245 = vmatprep.subr.mxu0 0.0
    %246 = vmatpush2.msra.mxu0 0.0
    %247 = vmatprep.subr.mxu0 0.0
    %248 = vmatpush2.msra.mxu0 0.0
    %249 = vmatprep.subr.mxu0 0.0
    %250 = vmatpush2.msra.mxu0 0.0
    %251 = vmatprep.subr.mxu0 0.0
    %252 = vmatpush2.msra.mxu0 0.0
    %253 = vmatprep.subr.mxu0 0.0
    %254 = vmatpush2.msra.mxu0 0.0
    %255 = vmatprep.subr.mxu0 0.0
    %256 = vmatpush2.msra.mxu0 0.0
    %257 = vmatprep.subr.mxu0 0.0
    %258 = vmatpush2.msra.mxu0 0.0
    %259 = vmatprep.subr.mxu0 0.0
    %260 = vmatpush2.msra.mxu0 0.0
    %261 = vmatprep.subr.mxu0 0.0
    %262 = vmatpush2.msra.mxu0 0.0
    %263 = vmatprep.mubr.f32.mxu0 0.0
    %264 = vmatmul.mubr.f32.gmra.mxu0 %v117
    %v265 = vpop.f32.mrf.mxu0
    %v266 = vadd.f32 %v111, %v265
    %v267 = vpop.f32.mrf.mxu0
    %268 = vmatprep.mubr.f32.mxu0 0.0
    %269 = vmatmul.mubr.f32.gmra.mxu0 %v120
    %v270 = vpop.f32.mrf.mxu0
    %v271 = vadd.f32 %v111, %v270
    %v272 = vpop.f32.mrf.mxu0
    %273 = vdwg.mxu0
    %v274 = vld [vmem:[#allocation7] sm:$0xff]
    %v275 = vld [vmem:[#allocation7 + $0x8] sm:$0xff]
    %v276 = vld [vmem:[#allocation7 + $0x10] sm:$0xff]
    %v277 = vld [vmem:[#allocation7 + $0x18] sm:$0xff]
    %v278 = vld [vmem:[#allocation7 + $0x20] sm:$0xff]
    %v279 = vld [vmem:[#allocation7 + $0x28] sm:$0xff]
    %v280 = vld [vmem:[#allocation7 + $0x30] sm:$0xff]
    %v281 = vld [vmem:[#allocation7 + $0x38] sm:$0xff]
    %v282 = vld [vmem:[#allocation7 + $0x40] sm:$0xff]
    %v283 = vld [vmem:[#allocation7 + $0x48] sm:$0xff]
    %v284 = vld [vmem:[#allocation7 + $0x50] sm:$0xff]
    %v285 = vld [vmem:[#allocation7 + $0x58] sm:$0xff]
    %v286 = vld [vmem:[#allocation7 + $0x60] sm:$0xff]
    %v287 = vld [vmem:[#allocation7 + $0x68] sm:$0xff]
    %v288 = vld [vmem:[#allocation7 + $0x70] sm:$0xff]
    %v289 = vld [vmem:[#allocation7 + $0x78] sm:$0xff]
    %v290 = vld [vmem:[#allocation7 + $0x80] sm:$0xff]
    %v291 = vld [vmem:[#allocation7 + $0x88] sm:$0xff]
    %v292 = vld [vmem:[#allocation7 + $0x90] sm:$0xff]
    %v293 = vld [vmem:[#allocation7 + $0x98] sm:$0xff]
    %v294 = vld [vmem:[#allocation7 + $0xa0] sm:$0xff]
    %v295 = vld [vmem:[#allocation7 + $0xa8] sm:$0xff]
    %v296 = vld [vmem:[#allocation7 + $0xb0] sm:$0xff]
    %v297 = vld [vmem:[#allocation7 + $0xb8] sm:$0xff]
    %v298 = vld [vmem:[#allocation7 + $0xc0] sm:$0xff]
    %v299 = vld [vmem:[#allocation7 + $0xc8] sm:$0xff]
    %v300 = vld [vmem:[#allocation7 + $0xd0] sm:$0xff]
    %v301 = vld [vmem:[#allocation7 + $0xd8] sm:$0xff]
    %v302 = vld [vmem:[#allocation7 + $0xe0] sm:$0xff]
    %v303 = vld [vmem:[#allocation7 + $0xe8] sm:$0xff]
    %v304 = vld [vmem:[#allocation7 + $0xf0] sm:$0xff]
    %v305 = vld [vmem:[#allocation7 + $0xf8] sm:$0xff]
    %v306 = vld [vmem:[#allocation7 + $0x100] sm:$0xff]
    %v307 = vld [vmem:[#allocation7 + $0x108] sm:$0xff]
    %v308 = vld [vmem:[#allocation7 + $0x110] sm:$0xff]
    %v309 = vld [vmem:[#allocation7 + $0x118] sm:$0xff]
    %v310 = vld [vmem:[#allocation7 + $0x120] sm:$0xff]
    %v311 = vld [vmem:[#allocation7 + $0x128] sm:$0xff]
    %v312 = vld [vmem:[#allocation7 + $0x130] sm:$0xff]
    %v313 = vld [vmem:[#allocation7 + $0x138] sm:$0xff]
    %v314 = vld [vmem:[#allocation7 + $0x140] sm:$0xff]
    %v315 = vld [vmem:[#allocation7 + $0x148] sm:$0xff]
    %v316 = vld [vmem:[#allocation7 + $0x150] sm:$0xff]
    %v317 = vld [vmem:[#allocation7 + $0x158] sm:$0xff]
    %v318 = vld [vmem:[#allocation7 + $0x160] sm:$0xff]
    %v319 = vld [vmem:[#allocation7 + $0x168] sm:$0xff]
    %v320 = vld [vmem:[#allocation7 + $0x170] sm:$0xff]
    %v321 = vld [vmem:[#allocation7 + $0x178] sm:$0xff]
    %s322 = scalar_lea.vmem [#allocation8], 1
    %v323 = vld [vmem:[%s322] ss:$2 sm:$0x7]
    %v325 = vlaneseq
    %v326 = vshrl.u32 %v325, 7
    %v327 = vsub.s32 0, %v326
    %v328 = vrot.slane %v323, %v327
    %v329 = vlaneseq
    %v330 = vshrl.u32 %v329, 7
    %v331 = vsub.s32 1, %v330
    %v332 = vrot.slane %v323, %v331
    %v333 = vlaneseq
    %v334 = vshrl.u32 %v333, 7
    %v335 = vsub.s32 2, %v334
    %v336 = vrot.slane %v323, %v335
    %340 = vmatprep.subr.mxu0 %v320
    %341 = vmatpush1.msra.mxu0 %v319
    %342 = vmatprep.subr.mxu0 %v317
    %343 = vmatpush1.msra.mxu0 %v316
    %344 = vmatprep.subr.mxu0 %v314
    %345 = vmatpush1.msra.mxu0 %v313
    %346 = vmatprep.subr.mxu0 %v311
    %347 = vmatpush1.msra.mxu0 %v310
    %348 = vmatprep.subr.mxu0 %v308
    %349 = vmatpush1.msra.mxu0 %v307
    %350 = vmatprep.subr.mxu0 %v305
    %351 = vmatpush1.msra.mxu0 %v304
    %352 = vmatprep.subr.mxu0 %v302
    %353 = vmatpush1.msra.mxu0 %v301
    %354 = vmatprep.subr.mxu0 %v299
    %355 = vmatpush1.msra.mxu0 %v298
    %356 = vmatprep.subr.mxu0 %v296
    %357 = vmatpush1.msra.mxu0 %v295
    %358 = vmatprep.subr.mxu0 %v293
    %359 = vmatpush1.msra.mxu0 %v292
    %360 = vmatprep.subr.mxu0 %v290
    %361 = vmatpush1.msra.mxu0 %v289
    %362 = vmatprep.subr.mxu0 %v287
    %363 = vmatpush1.msra.mxu0 %v286
    %364 = vmatprep.subr.mxu0 %v284
    %365 = vmatpush1.msra.mxu0 %v283
    %366 = vmatprep.subr.mxu0 %v281
    %367 = vmatpush1.msra.mxu0 %v280
    %368 = vmatprep.subr.mxu0 %v278
    %369 = vmatpush1.msra.mxu0 %v277
    %370 = vmatprep.subr.mxu0 %v275
    %371 = vmatpush1.msra.mxu0 %v274
    %372 = vmatprep.subr.mxu0 0.0
    %373 = vmatpush2.msra.mxu0 0.0
    %374 = vmatprep.subr.mxu0 0.0
    %375 = vmatpush2.msra.mxu0 0.0
    %376 = vmatprep.subr.mxu0 0.0
    %377 = vmatpush2.msra.mxu0 0.0
    %378 = vmatprep.subr.mxu0 0.0
    %379 = vmatpush2.msra.mxu0 0.0
    %380 = vmatprep.subr.mxu0 0.0
    %381 = vmatpush2.msra.mxu0 0.0
    %382 = vmatprep.subr.mxu0 0.0
    %383 = vmatpush2.msra.mxu0 0.0
    %384 = vmatprep.subr.mxu0 0.0
    %385 = vmatpush2.msra.mxu0 0.0
    %386 = vmatprep.subr.mxu0 0.0
    %387 = vmatpush2.msra.mxu0 0.0
    %388 = vmatprep.subr.mxu0 0.0
    %389 = vmatpush2.msra.mxu0 0.0
    %390 = vmatprep.subr.mxu0 0.0
    %391 = vmatpush2.msra.mxu0 0.0
    %392 = vmatprep.subr.mxu0 0.0
    %393 = vmatpush2.msra.mxu0 0.0
    %394 = vmatprep.subr.mxu0 0.0
    %395 = vmatpush2.msra.mxu0 0.0
    %396 = vmatprep.subr.mxu0 0.0
    %397 = vmatpush2.msra.mxu0 0.0
    %398 = vmatprep.subr.mxu0 0.0
    %399 = vmatpush2.msra.mxu0 0.0
    %400 = vmatprep.subr.mxu0 0.0
    %401 = vmatpush2.msra.mxu0 0.0
    %402 = vmatprep.subr.mxu0 0.0
    %403 = vmatpush2.msra.mxu0 0.0
    %404 = vmatprep.mubr.f32.mxu0 0.0
    %405 = vmatmul.mubr.f32.gmra.mxu0 0.0
    %v406 = vpop.f32.mrf.mxu0
    %v407 = vadd.f32 %v328, %v406
    %v408 = vpop.f32.mrf.mxu0
    %v409 = vadd.f32 %v332, %v408
    %410 = vdwg.mxu0
    %411 = vmatprep.subr.mxu0 0.0
    %412 = vmatpush1.msra.mxu0 %v321
    %413 = vmatprep.subr.mxu0 0.0
    %414 = vmatpush1.msra.mxu0 %v318
    %415 = vmatprep.subr.mxu0 0.0
    %416 = vmatpush1.msra.mxu0 %v315
    %417 = vmatprep.subr.mxu0 0.0
    %418 = vmatpush1.msra.mxu0 %v312
    %419 = vmatprep.subr.mxu0 0.0
    %420 = vmatpush1.msra.mxu0 %v309
    %421 = vmatprep.subr.mxu0 0.0
    %422 = vmatpush1.msra.mxu0 %v306
    %423 = vmatprep.subr.mxu0 0.0
    %424 = vmatpush1.msra.mxu0 %v303
    %425 = vmatprep.subr.mxu0 0.0
    %426 = vmatpush1.msra.mxu0 %v300
    %427 = vmatprep.subr.mxu0 0.0
    %428 = vmatpush1.msra.mxu0 %v297
    %429 = vmatprep.subr.mxu0 0.0
    %430 = vmatpush1.msra.mxu0 %v294
    %431 = vmatprep.subr.mxu0 0.0
    %432 = vmatpush1.msra.mxu0 %v291
    %433 = vmatprep.subr.mxu0 0.0
    %434 = vmatpush1.msra.mxu0 %v288
    %435 = vmatprep.subr.mxu0 0.0
    %436 = vmatpush1.msra.mxu0 %v285
    %437 = vmatprep.subr.mxu0 0.0
    %438 = vmatpush1.msra.mxu0 %v282
    %439 = vmatprep.subr.mxu0 0.0
    %440 = vmatpush1.msra.mxu0 %v279
    %441 = vmatprep.subr.mxu0 0.0
    %442 = vmatpush1.msra.mxu0 %v276
    %443 = vmatprep.subr.mxu0 0.0
    %444 = vmatpush2.msra.mxu0 0.0
    %445 = vmatprep.subr.mxu0 0.0
    %446 = vmatpush2.msra.mxu0 0.0
    %447 = vmatprep.subr.mxu0 0.0
    %448 = vmatpush2.msra.mxu0 0.0
    %449 = vmatprep.subr.mxu0 0.0
    %450 = vmatpush2.msra.mxu0 0.0
    %451 = vmatprep.subr.mxu0 0.0
    %452 = vmatpush2.msra.mxu0 0.0
    %453 = vmatprep.subr.mxu0 0.0
    %454 = vmatpush2.msra.mxu0 0.0
    %455 = vmatprep.subr.mxu0 0.0
    %456 = vmatpush2.msra.mxu0 0.0
    %457 = vmatprep.subr.mxu0 0.0
    %458 = vmatpush2.msra.mxu0 0.0
    %459 = vmatprep.subr.mxu0 0.0
    %460 = vmatpush2.msra.mxu0 0.0
    %461 = vmatprep.subr.mxu0 0.0
    %462 = vmatpush2.msra.mxu0 0.0
    %463 = vmatprep.subr.mxu0 0.0
    %464 = vmatpush2.msra.mxu0 0.0
    %465 = vmatprep.subr.mxu0 0.0
    %466 = vmatpush2.msra.mxu0 0.0
    %467 = vmatprep.subr.mxu0 0.0
    %468 = vmatpush2.msra.mxu0 0.0
    %469 = vmatprep.subr.mxu0 0.0
    %470 = vmatpush2.msra.mxu0 0.0
    %471 = vmatprep.subr.mxu0 0.0
    %472 = vmatpush2.msra.mxu0 0.0
    %473 = vmatprep.subr.mxu0 0.0
    %474 = vmatpush2.msra.mxu0 0.0
    %475 = vmatprep.mubr.f32.mxu0 0.0
    %476 = vmatmul.mubr.f32.gmra.mxu0 0.0
    %v477 = vpop.f32.mrf.mxu0
    %v478 = vadd.f32 %v336, %v477
    %v479 = vpop.f32.mrf.mxu0
    %480 = vdwg.mxu0
    %v481 = vadd.f32 %v189, %v407
    %v482 = vxor.u32 %v481, 2147483648
    %v483 = vmul.f32 %v482, 1.442695
    %v484 = vpow.pop %v483
    %v485 = vadd.f32 %v484, 1.0
    %v486 = vrcp.pop %v485
    %v487 = vmul.f32 1.0, %v486
    %v488 = vadd.f32 %v191, %v409
    %v489 = vxor.u32 %v488, 2147483648
    %v490 = vmul.f32 %v489, 1.442695
    %v491 = vpow.pop %v490
    %v492 = vadd.f32 %v491, 1.0
    %v493 = vrcp.pop %v492
    %v494 = vmul.f32 1.0, %v493
    %v495 = vmul.f32 %v487, %v478
    %v496 = vadd.f32 %v266, %v495
    %v497 = vtanh.pop %v496
    %v498 = vsub.f32 1.0, %v494
    %v499 = vmul.f32 %v498, %v497
    %v500 = vmul.f32 %v494, 0.0
    %v501 = vadd.f32 %v499, %v500
    %502 = vmatprep.subr.mxu0 %v320
    %503 = vmatpush1.msra.mxu0 %v319
    %504 = vmatprep.subr.mxu0 %v317
    %505 = vmatpush1.msra.mxu0 %v316
    %506 = vmatprep.subr.mxu0 %v314
    %507 = vmatpush1.msra.mxu0 %v313
    %508 = vmatprep.subr.mxu0 %v311
    %509 = vmatpush1.msra.mxu0 %v310
    %510 = vmatprep.subr.mxu0 %v308
    %511 = vmatpush1.msra.mxu0 %v307
    %512 = vmatprep.subr.mxu0 %v305
    %513 = vmatpush1.msra.mxu0 %v304
    %514 = vmatprep.subr.mxu0 %v302
    %515 = vmatpush1.msra.mxu0 %v301
    %516 = vmatprep.subr.mxu0 %v299
    %517 = vmatpush1.msra.mxu0 %v298
    %518 = vmatprep.subr.mxu0 %v296
    %519 = vmatpush1.msra.mxu0 %v295
    %520 = vmatprep.subr.mxu0 %v293
    %521 = vmatpush1.msra.mxu0 %v292
    %522 = vmatprep.subr.mxu0 %v290
    %523 = vmatpush1.msra.mxu0 %v289
    %524 = vmatprep.subr.mxu0 %v287
    %525 = vmatpush1.msra.mxu0 %v286
    %526 = vmatprep.subr.mxu0 %v284
    %527 = vmatpush1.msra.mxu0 %v283
    %528 = vmatprep.subr.mxu0 %v281
    %529 = vmatpush1.msra.mxu0 %v280
    %530 = vmatprep.subr.mxu0 %v278
    %531 = vmatpush1.msra.mxu0 %v277
    %532 = vmatprep.subr.mxu0 %v275
    %533 = vmatpush1.msra.mxu0 %v274
    %534 = vmatprep.subr.mxu0 0.0
    %535 = vmatpush2.msra.mxu0 0.0
    %536 = vmatprep.subr.mxu0 0.0
    %537 = vmatpush2.msra.mxu0 0.0
    %538 = vmatprep.subr.mxu0 0.0
    %539 = vmatpush2.msra.mxu0 0.0
    %540 = vmatprep.subr.mxu0 0.0
    %541 = vmatpush2.msra.mxu0 0.0
    %542 = vmatprep.subr.mxu0 0.0
    %543 = vmatpush2.msra.mxu0 0.0
    %544 = vmatprep.subr.mxu0 0.0
    %545 = vmatpush2.msra.mxu0 0.0
    %546 = vmatprep.subr.mxu0 0.0
    %547 = vmatpush2.msra.mxu0 0.0
    %548 = vmatprep.subr.mxu0 0.0
    %549 = vmatpush2.msra.mxu0 0.0
    %550 = vmatprep.subr.mxu0 0.0
    %551 = vmatpush2.msra.mxu0 0.0
    %552 = vmatprep.subr.mxu0 0.0
    %553 = vmatpush2.msra.mxu0 0.0
    %554 = vmatprep.subr.mxu0 0.0
    %555 = vmatpush2.msra.mxu0 0.0
    %556 = vmatprep.subr.mxu0 0.0
    %557 = vmatpush2.msra.mxu0 0.0
    %558 = vmatprep.subr.mxu0 0.0
    %559 = vmatpush2.msra.mxu0 0.0
    %560 = vmatprep.subr.mxu0 0.0
    %561 = vmatpush2.msra.mxu0 0.0
    %562 = vmatprep.subr.mxu0 0.0
    %563 = vmatpush2.msra.mxu0 0.0
    %564 = vmatprep.subr.mxu0 0.0
    %565 = vmatpush2.msra.mxu0 0.0
    %566 = vmatprep.mubr.f32.mxu0 0.0
    %567 = vmatmul.mubr.f32.gmra.mxu0 %v501
    %v568 = vpop.f32.mrf.mxu0
    %v569 = vadd.f32 %v328, %v568
    %v570 = vpop.f32.mrf.mxu0
    %v571 = vadd.f32 %v332, %v570
    %572 = vdwg.mxu0
    %573 = vmatprep.subr.mxu0 0.0
    %574 = vmatpush1.msra.mxu0 %v321
    %575 = vmatprep.subr.mxu0 0.0
    %576 = vmatpush1.msra.mxu0 %v318
    %577 = vmatprep.subr.mxu0 0.0
    %578 = vmatpush1.msra.mxu0 %v315
    %579 = vmatprep.subr.mxu0 0.0
    %580 = vmatpush1.msra.mxu0 %v312
    %581 = vmatprep.subr.mxu0 0.0
    %582 = vmatpush1.msra.mxu0 %v309
    %583 = vmatprep.subr.mxu0 0.0
    %584 = vmatpush1.msra.mxu0 %v306
    %585 = vmatprep.subr.mxu0 0.0
    %586 = vmatpush1.msra.mxu0 %v303
    %587 = vmatprep.subr.mxu0 0.0
    %588 = vmatpush1.msra.mxu0 %v300
    %589 = vmatprep.subr.mxu0 0.0
    %590 = vmatpush1.msra.mxu0 %v297
    %591 = vmatprep.subr.mxu0 0.0
    %592 = vmatpush1.msra.mxu0 %v294
    %593 = vmatprep.subr.mxu0 0.0
    %594 = vmatpush1.msra.mxu0 %v291
    %595 = vmatprep.subr.mxu0 0.0
    %596 = vmatpush1.msra.mxu0 %v288
    %597 = vmatprep.subr.mxu0 0.0
    %598 = vmatpush1.msra.mxu0 %v285
    %599 = vmatprep.subr.mxu0 0.0
    %600 = vmatpush1.msra.mxu0 %v282
    %601 = vmatprep.subr.mxu0 0.0
    %602 = vmatpush1.msra.mxu0 %v279
    %603 = vmatprep.subr.mxu0 0.0
    %604 = vmatpush1.msra.mxu0 %v276
    %605 = vmatprep.subr.mxu0 0.0
    %606 = vmatpush2.msra.mxu0 0.0
    %607 = vmatprep.subr.mxu0 0.0
    %608 = vmatpush2.msra.mxu0 0.0
    %609 = vmatprep.subr.mxu0 0.0
    %610 = vmatpush2.msra.mxu0 0.0
    %611 = vmatprep.subr.mxu0 0.0
    %612 = vmatpush2.msra.mxu0 0.0
    %613 = vmatprep.subr.mxu0 0.0
    %614 = vmatpush2.msra.mxu0 0.0
    %615 = vmatprep.subr.mxu0 0.0
    %616 = vmatpush2.msra.mxu0 0.0
    %617 = vmatprep.subr.mxu0 0.0
    %618 = vmatpush2.msra.mxu0 0.0
    %619 = vmatprep.subr.mxu0 0.0
    %620 = vmatpush2.msra.mxu0 0.0
    %621 = vmatprep.subr.mxu0 0.0
    %622 = vmatpush2.msra.mxu0 0.0
    %623 = vmatprep.subr.mxu0 0.0
    %624 = vmatpush2.msra.mxu0 0.0
    %625 = vmatprep.subr.mxu0 0.0
    %626 = vmatpush2.msra.mxu0 0.0
    %627 = vmatprep.subr.mxu0 0.0
    %628 = vmatpush2.msra.mxu0 0.0
    %629 = vmatprep.subr.mxu0 0.0
    %630 = vmatpush2.msra.mxu0 0.0
    %631 = vmatprep.subr.mxu0 0.0
    %632 = vmatpush2.msra.mxu0 0.0
    %633 = vmatprep.subr.mxu0 0.0
    %634 = vmatpush2.msra.mxu0 0.0
    %635 = vmatprep.subr.mxu0 0.0
    %636 = vmatpush2.msra.mxu0 0.0
    %637 = vmatprep.mubr.f32.mxu0 0.0
    %638 = vmatmul.mubr.f32.gmra.mxu0 %v501
    %v639 = vpop.f32.mrf.mxu0
    %v640 = vadd.f32 %v336, %v639
    %v641 = vpop.f32.mrf.mxu0
    %642 = vdwg.mxu0
    %v644 = vrot.slane %v569, 6
    %v646 = vadd.f32 %v189, %v644
    %v647 = vxor.u32 %v646, 2147483648
    %v648 = vmul.f32 %v647, 1.442695
    %v649 = vpow.pop %v648
    %v650 = vadd.f32 %v649, 1.0
    %v651 = vrcp.pop %v650
    %v652 = vmul.f32 1.0, %v651
    %v654 = vrot.slane %v571, 6
    %v656 = vadd.f32 %v191, %v654
    %v657 = vxor.u32 %v656, 2147483648
    %v658 = vmul.f32 %v657, 1.442695
    %v659 = vpow.pop %v658
    %v660 = vadd.f32 %v659, 1.0
    %v661 = vrcp.pop %v660
    %v662 = vmul.f32 1.0, %v661
    %v664 = vrot.slane %v640, 6
    %v666 = vmul.f32 %v652, %v664
    %v667 = vadd.f32 %v266, %v666
    %v668 = vtanh.pop %v667
    %v669 = vsub.f32 1.0, %v662
    %v670 = vmul.f32 %v669, %v668
    %v672 = vrot.slane %v501, 6
    %v674 = vmul.f32 %v662, %v672
    %v675 = vadd.f32 %v670, %v674
    %v677 = vrot.slane %v675, 2
    %679 = vmatprep.subr.mxu0 %v320
    %680 = vmatpush1.msra.mxu0 %v319
    %681 = vmatprep.subr.mxu0 %v317
    %682 = vmatpush1.msra.mxu0 %v316
    %683 = vmatprep.subr.mxu0 %v314
    %684 = vmatpush1.msra.mxu0 %v313
    %685 = vmatprep.subr.mxu0 %v311
    %686 = vmatpush1.msra.mxu0 %v310
    %687 = vmatprep.subr.mxu0 %v308
    %688 = vmatpush1.msra.mxu0 %v307
    %689 = vmatprep.subr.mxu0 %v305
    %690 = vmatpush1.msra.mxu0 %v304
    %691 = vmatprep.subr.mxu0 %v302
    %692 = vmatpush1.msra.mxu0 %v301
    %693 = vmatprep.subr.mxu0 %v299
    %694 = vmatpush1.msra.mxu0 %v298
    %695 = vmatprep.subr.mxu0 %v296
    %696 = vmatpush1.msra.mxu0 %v295
    %697 = vmatprep.subr.mxu0 %v293
    %698 = vmatpush1.msra.mxu0 %v292
    %699 = vmatprep.subr.mxu0 %v290
    %700 = vmatpush1.msra.mxu0 %v289
    %701 = vmatprep.subr.mxu0 %v287
    %702 = vmatpush1.msra.mxu0 %v286
    %703 = vmatprep.subr.mxu0 %v284
    %704 = vmatpush1.msra.mxu0 %v283
    %705 = vmatprep.subr.mxu0 %v281
    %706 = vmatpush1.msra.mxu0 %v280
    %707 = vmatprep.subr.mxu0 %v278
    %708 = vmatpush1.msra.mxu0 %v277
    %709 = vmatprep.subr.mxu0 %v275
    %710 = vmatpush1.msra.mxu0 %v274
    %711 = vmatprep.subr.mxu0 0.0
    %712 = vmatpush2.msra.mxu0 0.0
    %713 = vmatprep.subr.mxu0 0.0
    %714 = vmatpush2.msra.mxu0 0.0
    %715 = vmatprep.subr.mxu0 0.0
    %716 = vmatpush2.msra.mxu0 0.0
    %717 = vmatprep.subr.mxu0 0.0
    %718 = vmatpush2.msra.mxu0 0.0
    %719 = vmatprep.subr.mxu0 0.0
    %720 = vmatpush2.msra.mxu0 0.0
    %721 = vmatprep.subr.mxu0 0.0
    %722 = vmatpush2.msra.mxu0 0.0
    %723 = vmatprep.subr.mxu0 0.0
    %724 = vmatpush2.msra.mxu0 0.0
    %725 = vmatprep.subr.mxu0 0.0
    %726 = vmatpush2.msra.mxu0 0.0
    %727 = vmatprep.subr.mxu0 0.0
    %728 = vmatpush2.msra.mxu0 0.0
    %729 = vmatprep.subr.mxu0 0.0
    %730 = vmatpush2.msra.mxu0 0.0
    %731 = vmatprep.subr.mxu0 0.0
    %732 = vmatpush2.msra.mxu0 0.0
    %733 = vmatprep.subr.mxu0 0.0
    %734 = vmatpush2.msra.mxu0 0.0
    %735 = vmatprep.subr.mxu0 0.0
    %736 = vmatpush2.msra.mxu0 0.0
    %737 = vmatprep.subr.mxu0 0.0
    %738 = vmatpush2.msra.mxu0 0.0
    %739 = vmatprep.subr.mxu0 0.0
    %740 = vmatpush2.msra.mxu0 0.0
    %741 = vmatprep.subr.mxu0 0.0
    %742 = vmatpush2.msra.mxu0 0.0
    %743 = vmatprep.mubr.f32.mxu0 0.0
    %744 = vmatmul.mubr.f32.gmra.mxu0 %v677
    %v745 = vpop.f32.mrf.mxu0
    %v746 = vadd.f32 %v328, %v745
    %v747 = vpop.f32.mrf.mxu0
    %v748 = vadd.f32 %v332, %v747
    %749 = vdwg.mxu0
    %750 = vmatprep.subr.mxu0 0.0
    %751 = vmatpush1.msra.mxu0 %v321
    %752 = vmatprep.subr.mxu0 0.0
    %753 = vmatpush1.msra.mxu0 %v318
    %754 = vmatprep.subr.mxu0 0.0
    %755 = vmatpush1.msra.mxu0 %v315
    %756 = vmatprep.subr.mxu0 0.0
    %757 = vmatpush1.msra.mxu0 %v312
    %758 = vmatprep.subr.mxu0 0.0
    %759 = vmatpush1.msra.mxu0 %v309
    %760 = vmatprep.subr.mxu0 0.0
    %761 = vmatpush1.msra.mxu0 %v306
    %762 = vmatprep.subr.mxu0 0.0
    %763 = vmatpush1.msra.mxu0 %v303
    %764 = vmatprep.subr.mxu0 0.0
    %765 = vmatpush1.msra.mxu0 %v300
    %766 = vmatprep.subr.mxu0 0.0
    %767 = vmatpush1.msra.mxu0 %v297
    %768 = vmatprep.subr.mxu0 0.0
    %769 = vmatpush1.msra.mxu0 %v294
    %770 = vmatprep.subr.mxu0 0.0
    %771 = vmatpush1.msra.mxu0 %v291
    %772 = vmatprep.subr.mxu0 0.0
    %773 = vmatpush1.msra.mxu0 %v288
    %774 = vmatprep.subr.mxu0 0.0
    %775 = vmatpush1.msra.mxu0 %v285
    %776 = vmatprep.subr.mxu0 0.0
    %777 = vmatpush1.msra.mxu0 %v282
    %778 = vmatprep.subr.mxu0 0.0
    %779 = vmatpush1.msra.mxu0 %v279
    %780 = vmatprep.subr.mxu0 0.0
    %781 = vmatpush1.msra.mxu0 %v276
    %782 = vmatprep.subr.mxu0 0.0
    %783 = vmatpush2.msra.mxu0 0.0
    %784 = vmatprep.subr.mxu0 0.0
    %785 = vmatpush2.msra.mxu0 0.0
    %786 = vmatprep.subr.mxu0 0.0
    %787 = vmatpush2.msra.mxu0 0.0
    %788 = vmatprep.subr.mxu0 0.0
    %789 = vmatpush2.msra.mxu0 0.0
    %790 = vmatprep.subr.mxu0 0.0
    %791 = vmatpush2.msra.mxu0 0.0
    %792 = vmatprep.subr.mxu0 0.0
    %793 = vmatpush2.msra.mxu0 0.0
    %794 = vmatprep.subr.mxu0 0.0
    %795 = vmatpush2.msra.mxu0 0.0
    %796 = vmatprep.subr.mxu0 0.0
    %797 = vmatpush2.msra.mxu0 0.0
    %798 = vmatprep.subr.mxu0 0.0
    %799 = vmatpush2.msra.mxu0 0.0
    %800 = vmatprep.subr.mxu0 0.0
    %801 = vmatpush2.msra.mxu0 0.0
    %802 = vmatprep.subr.mxu0 0.0
    %803 = vmatpush2.msra.mxu0 0.0
    %804 = vmatprep.subr.mxu0 0.0
    %805 = vmatpush2.msra.mxu0 0.0
    %806 = vmatprep.subr.mxu0 0.0
    %807 = vmatpush2.msra.mxu0 0.0
    %808 = vmatprep.subr.mxu0 0.0
    %809 = vmatpush2.msra.mxu0 0.0
    %810 = vmatprep.subr.mxu0 0.0
    %811 = vmatpush2.msra.mxu0 0.0
    %812 = vmatprep.subr.mxu0 0.0
    %813 = vmatpush2.msra.mxu0 0.0
    %814 = vmatprep.mubr.f32.mxu0 0.0
    %815 = vmatmul.mubr.f32.gmra.mxu0 %v677
    %v816 = vpop.f32.mrf.mxu0
    %v817 = vadd.f32 %v336, %v816
    %v818 = vpop.f32.mrf.mxu0
    %819 = vdwg.mxu0
    %v821 = vrot.slane %v746, 4
    %v823 = vadd.f32 %v189, %v821
    %v824 = vxor.u32 %v823, 2147483648
    %v825 = vmul.f32 %v824, 1.442695
    %v826 = vpow.pop %v825
    %v827 = vadd.f32 %v826, 1.0
    %v828 = vrcp.pop %v827
    %v829 = vmul.f32 1.0, %v828
    %v831 = vrot.slane %v748, 4
    %v833 = vadd.f32 %v191, %v831
    %v834 = vxor.u32 %v833, 2147483648
    %v835 = vmul.f32 %v834, 1.442695
    %v836 = vpow.pop %v835
    %v837 = vadd.f32 %v836, 1.0
    %v838 = vrcp.pop %v837
    %v839 = vmul.f32 1.0, %v838
    %v841 = vrot.slane %v817, 4
    %v843 = vmul.f32 %v829, %v841
    %v844 = vadd.f32 %v266, %v843
    %v845 = vtanh.pop %v844
    %v846 = vsub.f32 1.0, %v839
    %v847 = vmul.f32 %v846, %v845
    %v848 = vrot.slane %v675, 6
    %v850 = vmul.f32 %v839, %v848
    %v851 = vadd.f32 %v847, %v850
    %v853 = vrot.slane %v851, 4
    %855 = vmatprep.subr.mxu0 %v320
    %856 = vmatpush1.msra.mxu0 %v319
    %857 = vmatprep.subr.mxu0 %v317
    %858 = vmatpush1.msra.mxu0 %v316
    %859 = vmatprep.subr.mxu0 %v314
    %860 = vmatpush1.msra.mxu0 %v313
    %861 = vmatprep.subr.mxu0 %v311
    %862 = vmatpush1.msra.mxu0 %v310
    %863 = vmatprep.subr.mxu0 %v308
    %864 = vmatpush1.msra.mxu0 %v307
    %865 = vmatprep.subr.mxu0 %v305
    %866 = vmatpush1.msra.mxu0 %v304
    %867 = vmatprep.subr.mxu0 %v302
    %868 = vmatpush1.msra.mxu0 %v301
    %869 = vmatprep.subr.mxu0 %v299
    %870 = vmatpush1.msra.mxu0 %v298
    %871 = vmatprep.subr.mxu0 %v296
    %872 = vmatpush1.msra.mxu0 %v295
    %873 = vmatprep.subr.mxu0 %v293
    %874 = vmatpush1.msra.mxu0 %v292
    %875 = vmatprep.subr.mxu0 %v290
    %876 = vmatpush1.msra.mxu0 %v289
    %877 = vmatprep.subr.mxu0 %v287
    %878 = vmatpush1.msra.mxu0 %v286
    %879 = vmatprep.subr.mxu0 %v284
    %880 = vmatpush1.msra.mxu0 %v283
    %881 = vmatprep.subr.mxu0 %v281
    %882 = vmatpush1.msra.mxu0 %v280
    %883 = vmatprep.subr.mxu0 %v278
    %884 = vmatpush1.msra.mxu0 %v277
    %885 = vmatprep.subr.mxu0 %v275
    %886 = vmatpush1.msra.mxu0 %v274
    %887 = vmatprep.subr.mxu0 0.0
    %888 = vmatpush2.msra.mxu0 0.0
    %889 = vmatprep.subr.mxu0 0.0
    %890 = vmatpush2.msra.mxu0 0.0
    %891 = vmatprep.subr.mxu0 0.0
    %892 = vmatpush2.msra.mxu0 0.0
    %893 = vmatprep.subr.mxu0 0.0
    %894 = vmatpush2.msra.mxu0 0.0
    %895 = vmatprep.subr.mxu0 0.0
    %896 = vmatpush2.msra.mxu0 0.0
    %897 = vmatprep.subr.mxu0 0.0
    %898 = vmatpush2.msra.mxu0 0.0
    %899 = vmatprep.subr.mxu0 0.0
    %900 = vmatpush2.msra.mxu0 0.0
    %901 = vmatprep.subr.mxu0 0.0
    %902 = vmatpush2.msra.mxu0 0.0
    %903 = vmatprep.subr.mxu0 0.0
    %904 = vmatpush2.msra.mxu0 0.0
    %905 = vmatprep.subr.mxu0 0.0
    %906 = vmatpush2.msra.mxu0 0.0
    %907 = vmatprep.subr.mxu0 0.0
    %908 = vmatpush2.msra.mxu0 0.0
    %909 = vmatprep.subr.mxu0 0.0
    %910 = vmatpush2.msra.mxu0 0.0
    %911 = vmatprep.subr.mxu0 0.0
    %912 = vmatpush2.msra.mxu0 0.0
    %913 = vmatprep.subr.mxu0 0.0
    %914 = vmatpush2.msra.mxu0 0.0
    %915 = vmatprep.subr.mxu0 0.0
    %916 = vmatpush2.msra.mxu0 0.0
    %917 = vmatprep.subr.mxu0 0.0
    %918 = vmatpush2.msra.mxu0 0.0
    %919 = vmatprep.mubr.f32.mxu0 0.0
    %920 = vmatmul.mubr.f32.gmra.mxu0 %v853
    %v921 = vpop.f32.mrf.mxu0
    %v922 = vadd.f32 %v328, %v921
    %v923 = vpop.f32.mrf.mxu0
    %v924 = vadd.f32 %v332, %v923
    %925 = vdwg.mxu0
    %926 = vmatprep.subr.mxu0 0.0
    %927 = vmatpush1.msra.mxu0 %v321
    %928 = vmatprep.subr.mxu0 0.0
    %929 = vmatpush1.msra.mxu0 %v318
    %930 = vmatprep.subr.mxu0 0.0
    %931 = vmatpush1.msra.mxu0 %v315
    %932 = vmatprep.subr.mxu0 0.0
    %933 = vmatpush1.msra.mxu0 %v312
    %934 = vmatprep.subr.mxu0 0.0
    %935 = vmatpush1.msra.mxu0 %v309
    %936 = vmatprep.subr.mxu0 0.0
    %937 = vmatpush1.msra.mxu0 %v306
    %938 = vmatprep.subr.mxu0 0.0
    %939 = vmatpush1.msra.mxu0 %v303
    %940 = vmatprep.subr.mxu0 0.0
    %941 = vmatpush1.msra.mxu0 %v300
    %942 = vmatprep.subr.mxu0 0.0
    %943 = vmatpush1.msra.mxu0 %v297
    %944 = vmatprep.subr.mxu0 0.0
    %945 = vmatpush1.msra.mxu0 %v294
    %946 = vmatprep.subr.mxu0 0.0
    %947 = vmatpush1.msra.mxu0 %v291
    %948 = vmatprep.subr.mxu0 0.0
    %949 = vmatpush1.msra.mxu0 %v288
    %950 = vmatprep.subr.mxu0 0.0
    %951 = vmatpush1.msra.mxu0 %v285
    %952 = vmatprep.subr.mxu0 0.0
    %953 = vmatpush1.msra.mxu0 %v282
    %954 = vmatprep.subr.mxu0 0.0
    %955 = vmatpush1.msra.mxu0 %v279
    %956 = vmatprep.subr.mxu0 0.0
    %957 = vmatpush1.msra.mxu0 %v276
    %958 = vmatprep.subr.mxu0 0.0
    %959 = vmatpush2.msra.mxu0 0.0
    %960 = vmatprep.subr.mxu0 0.0
    %961 = vmatpush2.msra.mxu0 0.0
    %962 = vmatprep.subr.mxu0 0.0
    %963 = vmatpush2.msra.mxu0 0.0
    %964 = vmatprep.subr.mxu0 0.0
    %965 = vmatpush2.msra.mxu0 0.0
    %966 = vmatprep.subr.mxu0 0.0
    %967 = vmatpush2.msra.mxu0 0.0
    %968 = vmatprep.subr.mxu0 0.0
    %969 = vmatpush2.msra.mxu0 0.0
    %970 = vmatprep.subr.mxu0 0.0
    %971 = vmatpush2.msra.mxu0 0.0
    %972 = vmatprep.subr.mxu0 0.0
    %973 = vmatpush2.msra.mxu0 0.0
    %974 = vmatprep.subr.mxu0 0.0
    %975 = vmatpush2.msra.mxu0 0.0
    %976 = vmatprep.subr.mxu0 0.0
    %977 = vmatpush2.msra.mxu0 0.0
    %978 = vmatprep.subr.mxu0 0.0
    %979 = vmatpush2.msra.mxu0 0.0
    %980 = vmatprep.subr.mxu0 0.0
    %981 = vmatpush2.msra.mxu0 0.0
    %982 = vmatprep.subr.mxu0 0.0
    %983 = vmatpush2.msra.mxu0 0.0
    %984 = vmatprep.subr.mxu0 0.0
    %985 = vmatpush2.msra.mxu0 0.0
    %986 = vmatprep.subr.mxu0 0.0
    %987 = vmatpush2.msra.mxu0 0.0
    %988 = vmatprep.subr.mxu0 0.0
    %989 = vmatpush2.msra.mxu0 0.0
    %990 = vmatprep.mubr.f32.mxu0 0.0
    %991 = vmatmul.mubr.f32.gmra.mxu0 %v853
    %v992 = vpop.f32.mrf.mxu0
    %v993 = vadd.f32 %v336, %v992
    %v994 = vpop.f32.mrf.mxu0
    %995 = vdwg.mxu0
    %v997 = vrot.slane %v922, 2
    %v999 = vadd.f32 %v189, %v997
    %v1000 = vxor.u32 %v999, 2147483648
    %v1001 = vmul.f32 %v1000, 1.442695
    %v1002 = vpow.pop %v1001
    %v1003 = vadd.f32 %v1002, 1.0
    %v1004 = vrcp.pop %v1003
    %v1005 = vmul.f32 1.0, %v1004
    %v1007 = vrot.slane %v924, 2
    %v1009 = vadd.f32 %v191, %v1007
    %v1010 = vxor.u32 %v1009, 2147483648
    %v1011 = vmul.f32 %v1010, 1.442695
    %v1012 = vpow.pop %v1011
    %v1013 = vadd.f32 %v1012, 1.0
    %v1014 = vrcp.pop %v1013
    %v1015 = vmul.f32 1.0, %v1014
    %v1017 = vrot.slane %v993, 2
    %v1019 = vmul.f32 %v1005, %v1017
    %v1020 = vadd.f32 %v266, %v1019
    %v1021 = vtanh.pop %v1020
    %v1022 = vsub.f32 1.0, %v1015
    %v1023 = vmul.f32 %v1022, %v1021
    %v1024 = vrot.slane %v851, 6
    %v1026 = vmul.f32 %v1015, %v1024
    %v1027 = vadd.f32 %v1023, %v1026
    %v1029 = vrot.slane %v1027, 6
    %1031 = vmatprep.subr.mxu0 %v320
    %1032 = vmatpush1.msra.mxu0 %v319
    %1033 = vmatprep.subr.mxu0 %v317
    %1034 = vmatpush1.msra.mxu0 %v316
    %1035 = vmatprep.subr.mxu0 %v314
    %1036 = vmatpush1.msra.mxu0 %v313
    %1037 = vmatprep.subr.mxu0 %v311
    %1038 = vmatpush1.msra.mxu0 %v310
    %1039 = vmatprep.subr.mxu0 %v308
    %1040 = vmatpush1.msra.mxu0 %v307
    %1041 = vmatprep.subr.mxu0 %v305
    %1042 = vmatpush1.msra.mxu0 %v304
    %1043 = vmatprep.subr.mxu0 %v302
    %1044 = vmatpush1.msra.mxu0 %v301
    %1045 = vmatprep.subr.mxu0 %v299
    %1046 = vmatpush1.msra.mxu0 %v298
    %1047 = vmatprep.subr.mxu0 %v296
    %1048 = vmatpush1.msra.mxu0 %v295
    %1049 = vmatprep.subr.mxu0 %v293
    %1050 = vmatpush1.msra.mxu0 %v292
    %1051 = vmatprep.subr.mxu0 %v290
    %1052 = vmatpush1.msra.mxu0 %v289
    %1053 = vmatprep.subr.mxu0 %v287
    %1054 = vmatpush1.msra.mxu0 %v286
    %1055 = vmatprep.subr.mxu0 %v284
    %1056 = vmatpush1.msra.mxu0 %v283
    %1057 = vmatprep.subr.mxu0 %v281
    %1058 = vmatpush1.msra.mxu0 %v280
    %1059 = vmatprep.subr.mxu0 %v278
    %1060 = vmatpush1.msra.mxu0 %v277
    %1061 = vmatprep.subr.mxu0 %v275
    %1062 = vmatpush1.msra.mxu0 %v274
    %1063 = vmatprep.subr.mxu0 0.0
    %1064 = vmatpush2.msra.mxu0 0.0
    %1065 = vmatprep.subr.mxu0 0.0
    %1066 = vmatpush2.msra.mxu0 0.0
    %1067 = vmatprep.subr.mxu0 0.0
    %1068 = vmatpush2.msra.mxu0 0.0
    %1069 = vmatprep.subr.mxu0 0.0
    %1070 = vmatpush2.msra.mxu0 0.0
    %1071 = vmatprep.subr.mxu0 0.0
    %1072 = vmatpush2.msra.mxu0 0.0
    %1073 = vmatprep.subr.mxu0 0.0
    %1074 = vmatpush2.msra.mxu0 0.0
    %1075 = vmatprep.subr.mxu0 0.0
    %1076 = vmatpush2.msra.mxu0 0.0
    %1077 = vmatprep.subr.mxu0 0.0
    %1078 = vmatpush2.msra.mxu0 0.0
    %1079 = vmatprep.subr.mxu0 0.0
    %1080 = vmatpush2.msra.mxu0 0.0
    %1081 = vmatprep.subr.mxu0 0.0
    %1082 = vmatpush2.msra.mxu0 0.0
    %1083 = vmatprep.subr.mxu0 0.0
    %1084 = vmatpush2.msra.mxu0 0.0
    %1085 = vmatprep.subr.mxu0 0.0
    %1086 = vmatpush2.msra.mxu0 0.0
    %1087 = vmatprep.subr.mxu0 0.0
    %1088 = vmatpush2.msra.mxu0 0.0
    %1089 = vmatprep.subr.mxu0 0.0
    %1090 = vmatpush2.msra.mxu0 0.0
    %1091 = vmatprep.subr.mxu0 0.0
    %1092 = vmatpush2.msra.mxu0 0.0
    %1093 = vmatprep.subr.mxu0 0.0
    %1094 = vmatpush2.msra.mxu0 0.0
    %1095 = vmatprep.mubr.f32.mxu0 0.0
    %1096 = vmatmul.mubr.f32.gmra.mxu0 %v1029
    %v1097 = vpop.f32.mrf.mxu0
    %v1098 = vadd.f32 %v328, %v1097
    %v1099 = vpop.f32.mrf.mxu0
    %v1100 = vadd.f32 %v332, %v1099
    %1101 = vdwg.mxu0
    %1102 = vmatprep.subr.mxu0 0.0
    %1103 = vmatpush1.msra.mxu0 %v321
    %1104 = vmatprep.subr.mxu0 0.0
    %1105 = vmatpush1.msra.mxu0 %v318
    %1106 = vmatprep.subr.mxu0 0.0
    %1107 = vmatpush1.msra.mxu0 %v315
    %1108 = vmatprep.subr.mxu0 0.0
    %1109 = vmatpush1.msra.mxu0 %v312
    %1110 = vmatprep.subr.mxu0 0.0
    %1111 = vmatpush1.msra.mxu0 %v309
    %1112 = vmatprep.subr.mxu0 0.0
    %1113 = vmatpush1.msra.mxu0 %v306
    %1114 = vmatprep.subr.mxu0 0.0
    %1115 = vmatpush1.msra.mxu0 %v303
    %1116 = vmatprep.subr.mxu0 0.0
    %1117 = vmatpush1.msra.mxu0 %v300
    %1118 = vmatprep.subr.mxu0 0.0
    %1119 = vmatpush1.msra.mxu0 %v297
    %1120 = vmatprep.subr.mxu0 0.0
    %1121 = vmatpush1.msra.mxu0 %v294
    %1122 = vmatprep.subr.mxu0 0.0
    %1123 = vmatpush1.msra.mxu0 %v291
    %1124 = vmatprep.subr.mxu0 0.0
    %1125 = vmatpush1.msra.mxu0 %v288
    %1126 = vmatprep.subr.mxu0 0.0
    %1127 = vmatpush1.msra.mxu0 %v285
    %1128 = vmatprep.subr.mxu0 0.0
    %1129 = vmatpush1.msra.mxu0 %v282
    %1130 = vmatprep.subr.mxu0 0.0
    %1131 = vmatpush1.msra.mxu0 %v279
    %1132 = vmatprep.subr.mxu0 0.0
    %1133 = vmatpush1.msra.mxu0 %v276
    %1134 = vmatprep.subr.mxu0 0.0
    %1135 = vmatpush2.msra.mxu0 0.0
    %1136 = vmatprep.subr.mxu0 0.0
    %1137 = vmatpush2.msra.mxu0 0.0
    %1138 = vmatprep.subr.mxu0 0.0
    %1139 = vmatpush2.msra.mxu0 0.0
    %1140 = vmatprep.subr.mxu0 0.0
    %1141 = vmatpush2.msra.mxu0 0.0
    %1142 = vmatprep.subr.mxu0 0.0
    %1143 = vmatpush2.msra.mxu0 0.0
    %1144 = vmatprep.subr.mxu0 0.0
    %1145 = vmatpush2.msra.mxu0 0.0
    %1146 = vmatprep.subr.mxu0 0.0
    %1147 = vmatpush2.msra.mxu0 0.0
    %1148 = vmatprep.subr.mxu0 0.0
    %1149 = vmatpush2.msra.mxu0 0.0
    %1150 = vmatprep.subr.mxu0 0.0
    %1151 = vmatpush2.msra.mxu0 0.0
    %1152 = vmatprep.subr.mxu0 0.0
    %1153 = vmatpush2.msra.mxu0 0.0
    %1154 = vmatprep.subr.mxu0 0.0
    %1155 = vmatpush2.msra.mxu0 0.0
    %1156 = vmatprep.subr.mxu0 0.0
    %1157 = vmatpush2.msra.mxu0 0.0
    %1158 = vmatprep.subr.mxu0 0.0
    %1159 = vmatpush2.msra.mxu0 0.0
    %1160 = vmatprep.subr.mxu0 0.0
    %1161 = vmatpush2.msra.mxu0 0.0
    %1162 = vmatprep.subr.mxu0 0.0
    %1163 = vmatpush2.msra.mxu0 0.0
    %1164 = vmatprep.subr.mxu0 0.0
    %1165 = vmatpush2.msra.mxu0 0.0
    %1166 = vmatprep.mubr.f32.mxu0 0.0
    %1167 = vmatmul.mubr.f32.gmra.mxu0 %v1029
    %v1168 = vpop.f32.mrf.mxu0
    %v1169 = vadd.f32 %v336, %v1168
    %v1170 = vpop.f32.mrf.mxu0
    %1171 = vdwg.mxu0
    %v1172 = vadd.f32 %v195, %v1098
    %v1173 = vxor.u32 %v1172, 2147483648
    %v1174 = vmul.f32 %v1173, 1.442695
    %v1175 = vpow.pop %v1174
    %v1176 = vadd.f32 %v1175, 1.0
    %v1177 = vrcp.pop %v1176
    %v1178 = vmul.f32 1.0, %v1177
    %v1179 = vadd.f32 %v197, %v1100
    %v1180 = vxor.u32 %v1179, 2147483648
    %v1181 = vmul.f32 %v1180, 1.442695
    %v1182 = vpow.pop %v1181
    %v1183 = vadd.f32 %v1182, 1.0
    %v1184 = vrcp.pop %v1183
    %v1185 = vmul.f32 1.0, %v1184
    %v1186 = vmul.f32 %v1178, %v1169
    %v1187 = vadd.f32 %v271, %v1186
    %v1188 = vtanh.pop %v1187
    %v1189 = vsub.f32 1.0, %v1185
    %v1190 = vmul.f32 %v1189, %v1188
    %v1191 = vmul.f32 %v1185, %v1029
    %v1192 = vadd.f32 %v1190, %v1191
    %1193 = vmatprep.subr.mxu0 %v320
    %1194 = vmatpush1.msra.mxu0 %v319
    %1195 = vmatprep.subr.mxu0 %v317
    %1196 = vmatpush1.msra.mxu0 %v316
    %1197 = vmatprep.subr.mxu0 %v314
    %1198 = vmatpush1.msra.mxu0 %v313
    %1199 = vmatprep.subr.mxu0 %v311
    %1200 = vmatpush1.msra.mxu0 %v310
    %1201 = vmatprep.subr.mxu0 %v308
    %1202 = vmatpush1.msra.mxu0 %v307
    %1203 = vmatprep.subr.mxu0 %v305
    %1204 = vmatpush1.msra.mxu0 %v304
    %1205 = vmatprep.subr.mxu0 %v302
    %1206 = vmatpush1.msra.mxu0 %v301
    %1207 = vmatprep.subr.mxu0 %v299
    %1208 = vmatpush1.msra.mxu0 %v298
    %1209 = vmatprep.subr.mxu0 %v296
    %1210 = vmatpush1.msra.mxu0 %v295
    %1211 = vmatprep.subr.mxu0 %v293
    %1212 = vmatpush1.msra.mxu0 %v292
    %1213 = vmatprep.subr.mxu0 %v290
    %1214 = vmatpush1.msra.mxu0 %v289
    %1215 = vmatprep.subr.mxu0 %v287
    %1216 = vmatpush1.msra.mxu0 %v286
    %1217 = vmatprep.subr.mxu0 %v284
    %1218 = vmatpush1.msra.mxu0 %v283
    %1219 = vmatprep.subr.mxu0 %v281
    %1220 = vmatpush1.msra.mxu0 %v280
    %1221 = vmatprep.subr.mxu0 %v278
    %1222 = vmatpush1.msra.mxu0 %v277
    %1223 = vmatprep.subr.mxu0 %v275
    %1224 = vmatpush1.msra.mxu0 %v274
    %1225 = vmatprep.subr.mxu0 0.0
    %1226 = vmatpush2.msra.mxu0 0.0
    %1227 = vmatprep.subr.mxu0 0.0
    %1228 = vmatpush2.msra.mxu0 0.0
    %1229 = vmatprep.subr.mxu0 0.0
    %1230 = vmatpush2.msra.mxu0 0.0
    %1231 = vmatprep.subr.mxu0 0.0
    %1232 = vmatpush2.msra.mxu0 0.0
    %1233 = vmatprep.subr.mxu0 0.0
    %1234 = vmatpush2.msra.mxu0 0.0
    %1235 = vmatprep.subr.mxu0 0.0
    %1236 = vmatpush2.msra.mxu0 0.0
    %1237 = vmatprep.subr.mxu0 0.0
    %1238 = vmatpush2.msra.mxu0 0.0
    %1239 = vmatprep.subr.mxu0 0.0
    %1240 = vmatpush2.msra.mxu0 0.0
    %1241 = vmatprep.subr.mxu0 0.0
    %1242 = vmatpush2.msra.mxu0 0.0
    %1243 = vmatprep.subr.mxu0 0.0
    %1244 = vmatpush2.msra.mxu0 0.0
    %1245 = vmatprep.subr.mxu0 0.0
    %1246 = vmatpush2.msra.mxu0 0.0
    %1247 = vmatprep.subr.mxu0 0.0
    %1248 = vmatpush2.msra.mxu0 0.0
    %1249 = vmatprep.subr.mxu0 0.0
    %1250 = vmatpush2.msra.mxu0 0.0
    %1251 = vmatprep.subr.mxu0 0.0
    %1252 = vmatpush2.msra.mxu0 0.0
    %1253 = vmatprep.subr.mxu0 0.0
    %1254 = vmatpush2.msra.mxu0 0.0
    %1255 = vmatprep.subr.mxu0 0.0
    %1256 = vmatpush2.msra.mxu0 0.0
    %1257 = vmatprep.mubr.f32.mxu0 0.0
    %1258 = vmatmul.mubr.f32.gmra.mxu0 %v1192
    %v1259 = vpop.f32.mrf.mxu0
    %v1260 = vadd.f32 %v328, %v1259
    %v1261 = vpop.f32.mrf.mxu0
    %v1262 = vadd.f32 %v332, %v1261
    %1263 = vdwg.mxu0
    %1264 = vmatprep.subr.mxu0 0.0
    %1265 = vmatpush1.msra.mxu0 %v321
    %1266 = vmatprep.subr.mxu0 0.0
    %1267 = vmatpush1.msra.mxu0 %v318
    %1268 = vmatprep.subr.mxu0 0.0
    %1269 = vmatpush1.msra.mxu0 %v315
    %1270 = vmatprep.subr.mxu0 0.0
    %1271 = vmatpush1.msra.mxu0 %v312
    %1272 = vmatprep.subr.mxu0 0.0
    %1273 = vmatpush1.msra.mxu0 %v309
    %1274 = vmatprep.subr.mxu0 0.0
    %1275 = vmatpush1.msra.mxu0 %v306
    %1276 = vmatprep.subr.mxu0 0.0
    %1277 = vmatpush1.msra.mxu0 %v303
    %1278 = vmatprep.subr.mxu0 0.0
    %1279 = vmatpush1.msra.mxu0 %v300
    %1280 = vmatprep.subr.mxu0 0.0
    %1281 = vmatpush1.msra.mxu0 %v297
    %1282 = vmatprep.subr.mxu0 0.0
    %1283 = vmatpush1.msra.mxu0 %v294
    %1284 = vmatprep.subr.mxu0 0.0
    %1285 = vmatpush1.msra.mxu0 %v291
    %1286 = vmatprep.subr.mxu0 0.0
    %1287 = vmatpush1.msra.mxu0 %v288
    %1288 = vmatprep.subr.mxu0 0.0
    %1289 = vmatpush1.msra.mxu0 %v285
    %1290 = vmatprep.subr.mxu0 0.0
    %1291 = vmatpush1.msra.mxu0 %v282
    %1292 = vmatprep.subr.mxu0 0.0
    %1293 = vmatpush1.msra.mxu0 %v279
    %1294 = vmatprep.subr.mxu0 0.0
    %1295 = vmatpush1.msra.mxu0 %v276
    %1296 = vmatprep.subr.mxu0 0.0
    %1297 = vmatpush2.msra.mxu0 0.0
    %1298 = vmatprep.subr.mxu0 0.0
    %1299 = vmatpush2.msra.mxu0 0.0
    %1300 = vmatprep.subr.mxu0 0.0
    %1301 = vmatpush2.msra.mxu0 0.0
    %1302 = vmatprep.subr.mxu0 0.0
    %1303 = vmatpush2.msra.mxu0 0.0
    %1304 = vmatprep.subr.mxu0 0.0
    %1305 = vmatpush2.msra.mxu0 0.0
    %1306 = vmatprep.subr.mxu0 0.0
    %1307 = vmatpush2.msra.mxu0 0.0
    %1308 = vmatprep.subr.mxu0 0.0
    %1309 = vmatpush2.msra.mxu0 0.0
    %1310 = vmatprep.subr.mxu0 0.0
    %1311 = vmatpush2.msra.mxu0 0.0
    %1312 = vmatprep.subr.mxu0 0.0
    %1313 = vmatpush2.msra.mxu0 0.0
    %1314 = vmatprep.subr.mxu0 0.0
    %1315 = vmatpush2.msra.mxu0 0.0
    %1316 = vmatprep.subr.mxu0 0.0
    %1317 = vmatpush2.msra.mxu0 0.0
    %1318 = vmatprep.subr.mxu0 0.0
    %1319 = vmatpush2.msra.mxu0 0.0
    %1320 = vmatprep.subr.mxu0 0.0
    %1321 = vmatpush2.msra.mxu0 0.0
    %1322 = vmatprep.subr.mxu0 0.0
    %1323 = vmatpush2.msra.mxu0 0.0
    %1324 = vmatprep.subr.mxu0 0.0
    %1325 = vmatpush2.msra.mxu0 0.0
    %1326 = vmatprep.subr.mxu0 0.0
    %1327 = vmatpush2.msra.mxu0 0.0
    %1328 = vmatprep.mubr.f32.mxu0 0.0
    %1329 = vmatmul.mubr.f32.gmra.mxu0 %v1192
    %v1330 = vpop.f32.mrf.mxu0
    %v1331 = vadd.f32 %v336, %v1330
    %v1332 = vpop.f32.mrf.mxu0
    %1333 = vdwg.mxu0
    %v1335 = vrot.slane %v1260, 6
    %v1337 = vadd.f32 %v195, %v1335
    %v1338 = vxor.u32 %v1337, 2147483648
    %v1339 = vmul.f32 %v1338, 1.442695
    %v1340 = vpow.pop %v1339
    %v1341 = vadd.f32 %v1340, 1.0
    %v1342 = vrcp.pop %v1341
    %v1343 = vmul.f32 1.0, %v1342
    %v1345 = vrot.slane %v1262, 6
    %v1347 = vadd.f32 %v197, %v1345
    %v1348 = vxor.u32 %v1347, 2147483648
    %v1349 = vmul.f32 %v1348, 1.442695
    %v1350 = vpow.pop %v1349
    %v1351 = vadd.f32 %v1350, 1.0
    %v1352 = vrcp.pop %v1351
    %v1353 = vmul.f32 1.0, %v1352
    %v1355 = vrot.slane %v1331, 6
    %v1357 = vmul.f32 %v1343, %v1355
    %v1358 = vadd.f32 %v271, %v1357
    %v1359 = vtanh.pop %v1358
    %v1360 = vsub.f32 1.0, %v1353
    %v1361 = vmul.f32 %v1360, %v1359
    %v1363 = vrot.slane %v1192, 6
    %v1365 = vmul.f32 %v1353, %v1363
    %v1366 = vadd.f32 %v1361, %v1365
    %v1368 = vrot.slane %v1366, 2
    %1370 = vmatprep.subr.mxu0 %v320
    %1371 = vmatpush1.msra.mxu0 %v319
    %1372 = vmatprep.subr.mxu0 %v317
    %1373 = vmatpush1.msra.mxu0 %v316
    %1374 = vmatprep.subr.mxu0 %v314
    %1375 = vmatpush1.msra.mxu0 %v313
    %1376 = vmatprep.subr.mxu0 %v311
    %1377 = vmatpush1.msra.mxu0 %v310
    %1378 = vmatprep.subr.mxu0 %v308
    %1379 = vmatpush1.msra.mxu0 %v307
    %1380 = vmatprep.subr.mxu0 %v305
    %1381 = vmatpush1.msra.mxu0 %v304
    %1382 = vmatprep.subr.mxu0 %v302
    %1383 = vmatpush1.msra.mxu0 %v301
    %1384 = vmatprep.subr.mxu0 %v299
    %1385 = vmatpush1.msra.mxu0 %v298
    %1386 = vmatprep.subr.mxu0 %v296
    %1387 = vmatpush1.msra.mxu0 %v295
    %1388 = vmatprep.subr.mxu0 %v293
    %1389 = vmatpush1.msra.mxu0 %v292
    %1390 = vmatprep.subr.mxu0 %v290
    %1391 = vmatpush1.msra.mxu0 %v289
    %1392 = vmatprep.subr.mxu0 %v287
    %1393 = vmatpush1.msra.mxu0 %v286
    %1394 = vmatprep.subr.mxu0 %v284
    %1395 = vmatpush1.msra.mxu0 %v283
    %1396 = vmatprep.subr.mxu0 %v281
    %1397 = vmatpush1.msra.mxu0 %v280
    %1398 = vmatprep.subr.mxu0 %v278
    %1399 = vmatpush1.msra.mxu0 %v277
    %1400 = vmatprep.subr.mxu0 %v275
    %1401 = vmatpush1.msra.mxu0 %v274
    %1402 = vmatprep.subr.mxu0 0.0
    %1403 = vmatpush2.msra.mxu0 0.0
    %1404 = vmatprep.subr.mxu0 0.0
    %1405 = vmatpush2.msra.mxu0 0.0
    %1406 = vmatprep.subr.mxu0 0.0
    %1407 = vmatpush2.msra.mxu0 0.0
    %1408 = vmatprep.subr.mxu0 0.0
    %1409 = vmatpush2.msra.mxu0 0.0
    %1410 = vmatprep.subr.mxu0 0.0
    %1411 = vmatpush2.msra.mxu0 0.0
    %1412 = vmatprep.subr.mxu0 0.0
    %1413 = vmatpush2.msra.mxu0 0.0
    %1414 = vmatprep.subr.mxu0 0.0
    %1415 = vmatpush2.msra.mxu0 0.0
    %1416 = vmatprep.subr.mxu0 0.0
    %1417 = vmatpush2.msra.mxu0 0.0
    %1418 = vmatprep.subr.mxu0 0.0
    %1419 = vmatpush2.msra.mxu0 0.0
    %1420 = vmatprep.subr.mxu0 0.0
    %1421 = vmatpush2.msra.mxu0 0.0
    %1422 = vmatprep.subr.mxu0 0.0
    %1423 = vmatpush2.msra.mxu0 0.0
    %1424 = vmatprep.subr.mxu0 0.0
    %1425 = vmatpush2.msra.mxu0 0.0
    %1426 = vmatprep.subr.mxu0 0.0
    %1427 = vmatpush2.msra.mxu0 0.0
    %1428 = vmatprep.subr.mxu0 0.0
    %1429 = vmatpush2.msra.mxu0 0.0
    %1430 = vmatprep.subr.mxu0 0.0
    %1431 = vmatpush2.msra.mxu0 0.0
    %1432 = vmatprep.subr.mxu0 0.0
    %1433 = vmatpush2.msra.mxu0 0.0
    %1434 = vmatprep.mubr.f32.mxu0 0.0
    %1435 = vmatmul.mubr.f32.gmra.mxu0 %v1368
    %v1436 = vpop.f32.mrf.mxu0
    %v1437 = vadd.f32 %v328, %v1436
    %v1438 = vpop.f32.mrf.mxu0
    %v1439 = vadd.f32 %v332, %v1438
    %1440 = vdwg.mxu0
    %1441 = vmatprep.subr.mxu0 0.0
    %1442 = vmatpush1.msra.mxu0 %v321
    %1443 = vmatprep.subr.mxu0 0.0
    %1444 = vmatpush1.msra.mxu0 %v318
    %1445 = vmatprep.subr.mxu0 0.0
    %1446 = vmatpush1.msra.mxu0 %v315
    %1447 = vmatprep.subr.mxu0 0.0
    %1448 = vmatpush1.msra.mxu0 %v312
    %1449 = vmatprep.subr.mxu0 0.0
    %1450 = vmatpush1.msra.mxu0 %v309
    %1451 = vmatprep.subr.mxu0 0.0
    %1452 = vmatpush1.msra.mxu0 %v306
    %1453 = vmatprep.subr.mxu0 0.0
    %1454 = vmatpush1.msra.mxu0 %v303
    %1455 = vmatprep.subr.mxu0 0.0
    %1456 = vmatpush1.msra.mxu0 %v300
    %1457 = vmatprep.subr.mxu0 0.0
    %1458 = vmatpush1.msra.mxu0 %v297
    %1459 = vmatprep.subr.mxu0 0.0
    %1460 = vmatpush1.msra.mxu0 %v294
    %1461 = vmatprep.subr.mxu0 0.0
    %1462 = vmatpush1.msra.mxu0 %v291
    %1463 = vmatprep.subr.mxu0 0.0
    %1464 = vmatpush1.msra.mxu0 %v288
    %1465 = vmatprep.subr.mxu0 0.0
    %1466 = vmatpush1.msra.mxu0 %v285
    %1467 = vmatprep.subr.mxu0 0.0
    %1468 = vmatpush1.msra.mxu0 %v282
    %1469 = vmatprep.subr.mxu0 0.0
    %1470 = vmatpush1.msra.mxu0 %v279
    %1471 = vmatprep.subr.mxu0 0.0
    %1472 = vmatpush1.msra.mxu0 %v276
    %1473 = vmatprep.subr.mxu0 0.0
    %1474 = vmatpush2.msra.mxu0 0.0
    %1475 = vmatprep.subr.mxu0 0.0
    %1476 = vmatpush2.msra.mxu0 0.0
    %1477 = vmatprep.subr.mxu0 0.0
    %1478 = vmatpush2.msra.mxu0 0.0
    %1479 = vmatprep.subr.mxu0 0.0
    %1480 = vmatpush2.msra.mxu0 0.0
    %1481 = vmatprep.subr.mxu0 0.0
    %1482 = vmatpush2.msra.mxu0 0.0
    %1483 = vmatprep.subr.mxu0 0.0
    %1484 = vmatpush2.msra.mxu0 0.0
    %1485 = vmatprep.subr.mxu0 0.0
    %1486 = vmatpush2.msra.mxu0 0.0
    %1487 = vmatprep.subr.mxu0 0.0
    %1488 = vmatpush2.msra.mxu0 0.0
    %1489 = vmatprep.subr.mxu0 0.0
    %1490 = vmatpush2.msra.mxu0 0.0
    %1491 = vmatprep.subr.mxu0 0.0
    %1492 = vmatpush2.msra.mxu0 0.0
    %1493 = vmatprep.subr.mxu0 0.0
    %1494 = vmatpush2.msra.mxu0 0.0
    %1495 = vmatprep.subr.mxu0 0.0
    %1496 = vmatpush2.msra.mxu0 0.0
    %1497 = vmatprep.subr.mxu0 0.0
    %1498 = vmatpush2.msra.mxu0 0.0
    %1499 = vmatprep.subr.mxu0 0.0
    %1500 = vmatpush2.msra.mxu0 0.0
    %1501 = vmatprep.subr.mxu0 0.0
    %1502 = vmatpush2.msra.mxu0 0.0
    %1503 = vmatprep.subr.mxu0 0.0
    %1504 = vmatpush2.msra.mxu0 0.0
    %1505 = vmatprep.mubr.f32.mxu0 0.0
    %1506 = vmatmul.mubr.f32.gmra.mxu0 %v1368
    %v1507 = vpop.f32.mrf.mxu0
    %v1508 = vadd.f32 %v336, %v1507
    %v1509 = vpop.f32.mrf.mxu0
    %1510 = vdwg.mxu0
    %v1512 = vrot.slane %v1437, 4
    %v1514 = vadd.f32 %v195, %v1512
    %v1515 = vxor.u32 %v1514, 2147483648
    %v1516 = vmul.f32 %v1515, 1.442695
    %v1517 = vpow.pop %v1516
    %v1518 = vadd.f32 %v1517, 1.0
    %v1519 = vrcp.pop %v1518
    %v1520 = vmul.f32 1.0, %v1519
    %v1522 = vrot.slane %v1439, 4
    %v1524 = vadd.f32 %v197, %v1522
    %v1525 = vxor.u32 %v1524, 2147483648
    %v1526 = vmul.f32 %v1525, 1.442695
    %v1527 = vpow.pop %v1526
    %v1528 = vadd.f32 %v1527, 1.0
    %v1529 = vrcp.pop %v1528
    %v1530 = vmul.f32 1.0, %v1529
    %v1532 = vrot.slane %v1508, 4
    %v1534 = vmul.f32 %v1520, %v1532
    %v1535 = vadd.f32 %v271, %v1534
    %v1536 = vtanh.pop %v1535
    %v1537 = vsub.f32 1.0, %v1530
    %v1538 = vmul.f32 %v1537, %v1536
    %v1539 = vrot.slane %v1366, 6
    %v1541 = vmul.f32 %v1530, %v1539
    %v1542 = vadd.f32 %v1538, %v1541
    %v1544 = vrot.slane %v1542, 4
    %1546 = vmatprep.subr.mxu0 %v320
    %1547 = vmatpush1.msra.mxu0 %v319
    %1548 = vmatprep.subr.mxu0 %v317
    %1549 = vmatpush1.msra.mxu0 %v316
    %1550 = vmatprep.subr.mxu0 %v314
    %1551 = vmatpush1.msra.mxu0 %v313
    %1552 = vmatprep.subr.mxu0 %v311
    %1553 = vmatpush1.msra.mxu0 %v310
    %1554 = vmatprep.subr.mxu0 %v308
    %1555 = vmatpush1.msra.mxu0 %v307
    %1556 = vmatprep.subr.mxu0 %v305
    %1557 = vmatpush1.msra.mxu0 %v304
    %1558 = vmatprep.subr.mxu0 %v302
    %1559 = vmatpush1.msra.mxu0 %v301
    %1560 = vmatprep.subr.mxu0 %v299
    %1561 = vmatpush1.msra.mxu0 %v298
    %1562 = vmatprep.subr.mxu0 %v296
    %1563 = vmatpush1.msra.mxu0 %v295
    %1564 = vmatprep.subr.mxu0 %v293
    %1565 = vmatpush1.msra.mxu0 %v292
    %1566 = vmatprep.subr.mxu0 %v290
    %1567 = vmatpush1.msra.mxu0 %v289
    %1568 = vmatprep.subr.mxu0 %v287
    %1569 = vmatpush1.msra.mxu0 %v286
    %1570 = vmatprep.subr.mxu0 %v284
    %1571 = vmatpush1.msra.mxu0 %v283
    %1572 = vmatprep.subr.mxu0 %v281
    %1573 = vmatpush1.msra.mxu0 %v280
    %1574 = vmatprep.subr.mxu0 %v278
    %1575 = vmatpush1.msra.mxu0 %v277
    %1576 = vmatprep.subr.mxu0 %v275
    %1577 = vmatpush1.msra.mxu0 %v274
    %1578 = vmatprep.subr.mxu0 0.0
    %1579 = vmatpush2.msra.mxu0 0.0
    %1580 = vmatprep.subr.mxu0 0.0
    %1581 = vmatpush2.msra.mxu0 0.0
    %1582 = vmatprep.subr.mxu0 0.0
    %1583 = vmatpush2.msra.mxu0 0.0
    %1584 = vmatprep.subr.mxu0 0.0
    %1585 = vmatpush2.msra.mxu0 0.0
    %1586 = vmatprep.subr.mxu0 0.0
    %1587 = vmatpush2.msra.mxu0 0.0
    %1588 = vmatprep.subr.mxu0 0.0
    %1589 = vmatpush2.msra.mxu0 0.0
    %1590 = vmatprep.subr.mxu0 0.0
    %1591 = vmatpush2.msra.mxu0 0.0
    %1592 = vmatprep.subr.mxu0 0.0
    %1593 = vmatpush2.msra.mxu0 0.0
    %1594 = vmatprep.subr.mxu0 0.0
    %1595 = vmatpush2.msra.mxu0 0.0
    %1596 = vmatprep.subr.mxu0 0.0
    %1597 = vmatpush2.msra.mxu0 0.0
    %1598 = vmatprep.subr.mxu0 0.0
    %1599 = vmatpush2.msra.mxu0 0.0
    %1600 = vmatprep.subr.mxu0 0.0
    %1601 = vmatpush2.msra.mxu0 0.0
    %1602 = vmatprep.subr.mxu0 0.0
    %1603 = vmatpush2.msra.mxu0 0.0
    %1604 = vmatprep.subr.mxu0 0.0
    %1605 = vmatpush2.msra.mxu0 0.0
    %1606 = vmatprep.subr.mxu0 0.0
    %1607 = vmatpush2.msra.mxu0 0.0
    %1608 = vmatprep.subr.mxu0 0.0
    %1609 = vmatpush2.msra.mxu0 0.0
    %1610 = vmatprep.mubr.f32.mxu0 0.0
    %1611 = vmatmul.mubr.f32.gmra.mxu0 %v1544
    %v1612 = vpop.f32.mrf.mxu0
    %v1613 = vadd.f32 %v328, %v1612
    %v1614 = vpop.f32.mrf.mxu0
    %v1615 = vadd.f32 %v332, %v1614
    %1616 = vdwg.mxu0
    %1617 = vmatprep.subr.mxu0 0.0
    %1618 = vmatpush1.msra.mxu0 %v321
    %1619 = vmatprep.subr.mxu0 0.0
    %1620 = vmatpush1.msra.mxu0 %v318
    %1621 = vmatprep.subr.mxu0 0.0
    %1622 = vmatpush1.msra.mxu0 %v315
    %1623 = vmatprep.subr.mxu0 0.0
    %1624 = vmatpush1.msra.mxu0 %v312
    %1625 = vmatprep.subr.mxu0 0.0
    %1626 = vmatpush1.msra.mxu0 %v309
    %1627 = vmatprep.subr.mxu0 0.0
    %1628 = vmatpush1.msra.mxu0 %v306
    %1629 = vmatprep.subr.mxu0 0.0
    %1630 = vmatpush1.msra.mxu0 %v303
    %1631 = vmatprep.subr.mxu0 0.0
    %1632 = vmatpush1.msra.mxu0 %v300
    %1633 = vmatprep.subr.mxu0 0.0
    %1634 = vmatpush1.msra.mxu0 %v297
    %1635 = vmatprep.subr.mxu0 0.0
    %1636 = vmatpush1.msra.mxu0 %v294
    %1637 = vmatprep.subr.mxu0 0.0
    %1638 = vmatpush1.msra.mxu0 %v291
    %1639 = vmatprep.subr.mxu0 0.0
    %1640 = vmatpush1.msra.mxu0 %v288
    %1641 = vmatprep.subr.mxu0 0.0
    %1642 = vmatpush1.msra.mxu0 %v285
    %1643 = vmatprep.subr.mxu0 0.0
    %1644 = vmatpush1.msra.mxu0 %v282
    %1645 = vmatprep.subr.mxu0 0.0
    %1646 = vmatpush1.msra.mxu0 %v279
    %1647 = vmatprep.subr.mxu0 0.0
    %1648 = vmatpush1.msra.mxu0 %v276
    %1649 = vmatprep.subr.mxu0 0.0
    %1650 = vmatpush2.msra.mxu0 0.0
    %1651 = vmatprep.subr.mxu0 0.0
    %1652 = vmatpush2.msra.mxu0 0.0
    %1653 = vmatprep.subr.mxu0 0.0
    %1654 = vmatpush2.msra.mxu0 0.0
    %1655 = vmatprep.subr.mxu0 0.0
    %1656 = vmatpush2.msra.mxu0 0.0
    %1657 = vmatprep.subr.mxu0 0.0
    %1658 = vmatpush2.msra.mxu0 0.0
    %1659 = vmatprep.subr.mxu0 0.0
    %1660 = vmatpush2.msra.mxu0 0.0
    %1661 = vmatprep.subr.mxu0 0.0
    %1662 = vmatpush2.msra.mxu0 0.0
    %1663 = vmatprep.subr.mxu0 0.0
    %1664 = vmatpush2.msra.mxu0 0.0
    %1665 = vmatprep.subr.mxu0 0.0
    %1666 = vmatpush2.msra.mxu0 0.0
    %1667 = vmatprep.subr.mxu0 0.0
    %1668 = vmatpush2.msra.mxu0 0.0
    %1669 = vmatprep.subr.mxu0 0.0
    %1670 = vmatpush2.msra.mxu0 0.0
    %1671 = vmatprep.subr.mxu0 0.0
    %1672 = vmatpush2.msra.mxu0 0.0
    %1673 = vmatprep.subr.mxu0 0.0
    %1674 = vmatpush2.msra.mxu0 0.0
    %1675 = vmatprep.subr.mxu0 0.0
    %1676 = vmatpush2.msra.mxu0 0.0
    %1677 = vmatprep.subr.mxu0 0.0
    %1678 = vmatpush2.msra.mxu0 0.0
    %1679 = vmatprep.subr.mxu0 0.0
    %1680 = vmatpush2.msra.mxu0 0.0
    %1681 = vmatprep.mubr.f32.mxu0 0.0
    %1682 = vmatmul.mubr.f32.gmra.mxu0 %v1544
    %v1683 = vpop.f32.mrf.mxu0
    %v1684 = vadd.f32 %v336, %v1683
    %v1685 = vpop.f32.mrf.mxu0
    %1686 = vdwg.mxu0
    %v1688 = vrot.slane %v1613, 2
    %v1690 = vadd.f32 %v195, %v1688
    %v1691 = vxor.u32 %v1690, 2147483648
    %v1692 = vmul.f32 %v1691, 1.442695
    %v1693 = vpow.pop %v1692
    %v1694 = vadd.f32 %v1693, 1.0
    %v1695 = vrcp.pop %v1694
    %v1696 = vmul.f32 1.0, %v1695
    %v1698 = vrot.slane %v1615, 2
    %v1700 = vadd.f32 %v197, %v1698
    %v1701 = vxor.u32 %v1700, 2147483648
    %v1702 = vmul.f32 %v1701, 1.442695
    %v1703 = vpow.pop %v1702
    %v1704 = vadd.f32 %v1703, 1.0
    %v1705 = vrcp.pop %v1704
    %v1706 = vmul.f32 1.0, %v1705
    %v1708 = vrot.slane %v1684, 2
    %v1710 = vmul.f32 %v1696, %v1708
    %v1711 = vadd.f32 %v271, %v1710
    %v1712 = vtanh.pop %v1711
    %v1713 = vsub.f32 1.0, %v1706
    %v1714 = vmul.f32 %v1713, %v1712
    %v1715 = vrot.slane %v1542, 6
    %v1717 = vmul.f32 %v1706, %v1715
    %v1718 = vadd.f32 %v1714, %v1717
    %v1719 = vlaneseq
    %v1720 = vand.u32 %v1719, 127
    %vm1721 = vcmask 1047558
    %v1722 = vsel %vm1721, %v1718, 0.0
    %1723 = vadd.xlane.f32.xlu0 %v1722
    %v1724 = vpop.xlane.xlu0 %1723
    %v1725 = vmul.f32 %v1724, 0.03125
    %vm1726 = vcmp.lt.s32.totalorder %v1720, 32
    %v1727 = vsub.f32 %v1718, %v1725
    %v1728 = vsel %vm1726, %v1727, 0.0
    %v1729 = vmul.f32 %v1728, %v1728
    %v1730 = vsel %vm1721, %v1729, 0.0
    %1731 = vadd.xlane.f32.xlu0 %v1730
    %v1732 = vpop.xlane.xlu0 %1731
    %v1733 = vmul.f32 %v1732, 0.03125
    %v1734 = vadd.f32 %v1733, 1e-05
    %v1735 = vrsqrt.pop %v1734
    %v1736 = vmul.f32 %v1728, %v1735
    %v1737 = vld [vmem:[#allocation10] sm:$0xff]
    %v1738 = vld [vmem:[#allocation10 + $0x8] sm:$0xff]
    %v1739 = vld [vmem:[#allocation10 + $0x10] sm:$0xff]
    %v1740 = vld [vmem:[#allocation10 + $0x18] sm:$0xff]
    %v1741 = vld [vmem:[#allocation10 + $0x20] sm:$0xff]
    %v1742 = vld [vmem:[#allocation10 + $0x28] sm:$0xff]
    %v1743 = vld [vmem:[#allocation10 + $0x30] sm:$0xff]
    %v1744 = vld [vmem:[#allocation10 + $0x38] sm:$0xff]
    %v1745 = vld [vmem:[#allocation10 + $0x40] sm:$0xff]
    %v1746 = vld [vmem:[#allocation10 + $0x48] sm:$0xff]
    %v1747 = vld [vmem:[#allocation10 + $0x50] sm:$0xff]
    %v1748 = vld [vmem:[#allocation10 + $0x58] sm:$0xff]
    %v1749 = vld [vmem:[#allocation10 + $0x60] sm:$0xff]
    %v1750 = vld [vmem:[#allocation10 + $0x68] sm:$0xff]
    %v1751 = vld [vmem:[#allocation10 + $0x70] sm:$0xff]
    %v1752 = vld [vmem:[#allocation10 + $0x78] sm:$0xff]
    %v1753 = vld [vmem:[%s5] sm:$0x1]
    %v1755 = vlaneseq
    %v1756 = vshrl.u32 %v1755, 7
    %v1757 = vsub.s32 0, %v1756
    %v1758 = vrot.slane %v1753, %v1757
    %v1761 = vrot.slane %v1736, 6
    %1763 = vmatprep.subr.mxu0 0.0
    %1764 = vmatpush1.msra.mxu0 %v1752
    %1765 = vmatprep.subr.mxu0 0.0
    %1766 = vmatpush1.msra.mxu0 %v1751
    %1767 = vmatprep.subr.mxu0 0.0
    %1768 = vmatpush1.msra.mxu0 %v1750
    %1769 = vmatprep.subr.mxu0 0.0
    %1770 = vmatpush1.msra.mxu0 %v1749
    %1771 = vmatprep.subr.mxu0 0.0
    %1772 = vmatpush1.msra.mxu0 %v1748
    %1773 = vmatprep.subr.mxu0 0.0
    %1774 = vmatpush1.msra.mxu0 %v1747
    %1775 = vmatprep.subr.mxu0 0.0
    %1776 = vmatpush1.msra.mxu0 %v1746
    %1777 = vmatprep.subr.mxu0 0.0
    %1778 = vmatpush1.msra.mxu0 %v1745
    %1779 = vmatprep.subr.mxu0 0.0
    %1780 = vmatpush1.msra.mxu0 %v1744
    %1781 = vmatprep.subr.mxu0 0.0
    %1782 = vmatpush1.msra.mxu0 %v1743
    %1783 = vmatprep.subr.mxu0 0.0
    %1784 = vmatpush1.msra.mxu0 %v1742
    %1785 = vmatprep.subr.mxu0 0.0
    %1786 = vmatpush1.msra.mxu0 %v1741
    %1787 = vmatprep.subr.mxu0 0.0
    %1788 = vmatpush1.msra.mxu0 %v1740
    %1789 = vmatprep.subr.mxu0 0.0
    %1790 = vmatpush1.msra.mxu0 %v1739
    %1791 = vmatprep.subr.mxu0 0.0
    %1792 = vmatpush1.msra.mxu0 %v1738
    %1793 = vmatprep.subr.mxu0 0.0
    %1794 = vmatpush1.msra.mxu0 %v1737
    %1795 = vmatprep.subr.mxu0 0.0
    %1796 = vmatpush2.msra.mxu0 0.0
    %1797 = vmatprep.subr.mxu0 0.0
    %1798 = vmatpush2.msra.mxu0 0.0
    %1799 = vmatprep.subr.mxu0 0.0
    %1800 = vmatpush2.msra.mxu0 0.0
    %1801 = vmatprep.subr.mxu0 0.0
    %1802 = vmatpush2.msra.mxu0 0.0
    %1803 = vmatprep.subr.mxu0 0.0
    %1804 = vmatpush2.msra.mxu0 0.0
    %1805 = vmatprep.subr.mxu0 0.0
    %1806 = vmatpush2.msra.mxu0 0.0
    %1807 = vmatprep.subr.mxu0 0.0
    %1808 = vmatpush2.msra.mxu0 0.0
    %1809 = vmatprep.subr.mxu0 0.0
    %1810 = vmatpush2.msra.mxu0 0.0
    %1811 = vmatprep.subr.mxu0 0.0
    %1812 = vmatpush2.msra.mxu0 0.0
    %1813 = vmatprep.subr.mxu0 0.0
    %1814 = vmatpush2.msra.mxu0 0.0
    %1815 = vmatprep.subr.mxu0 0.0
    %1816 = vmatpush2.msra.mxu0 0.0
    %1817 = vmatprep.subr.mxu0 0.0
    %1818 = vmatpush2.msra.mxu0 0.0
    %1819 = vmatprep.subr.mxu0 0.0
    %1820 = vmatpush2.msra.mxu0 0.0
    %1821 = vmatprep.subr.mxu0 0.0
    %1822 = vmatpush2.msra.mxu0 0.0
    %1823 = vmatprep.subr.mxu0 0.0
    %1824 = vmatpush2.msra.mxu0 0.0
    %1825 = vmatprep.subr.mxu0 0.0
    %1826 = vmatpush2.msra.mxu0 0.0
    %1827 = vmatprep.mubr.f32.mxu0 0.0
    %1828 = vmatmul.mubr.f32.gmra.mxu0 %v1761
    %v1829 = vpop.f32.mrf.mxu0
    %v1830 = vadd.f32 %v1758, %v1829
    %v1831 = vpop.f32.mrf.mxu0
    %1832 = vdwg.mxu0
    %vm1833 = vcmp.lt.s32.totalorder %v1720, 4
    %v1834 = vsel %vm1833, %v1830, -1e+30
    %vm1835 = vcmask 1041408
    %v1836 = vsel %vm1835, %v1834, -inf
    %1837 = vmax.xlane.f32.xlu0 %v1836
    %v1838 = vpop.xlane.xlu0 %1837
    %v1839 = vsub.f32 %v1834, %v1838
    %v1840 = vmul.f32 %v1839, 1.442695
    %v1841 = vpow.pop %v1840
    %v1842 = vsel %vm1835, %v1841, 0.0
    %1843 = vadd.xlane.f32.xlu0 %v1842
    %v1844 = vpop.xlane.xlu0 %1843
    %v1845 = vrcp.pop %v1844
    %v1846 = vmul.f32 %v1841, %v1845
    %vm1847 = vcmp.eq.s32.totalorder %v1720, 4
    %v1848 = vsel %vm1847, %v1830, %v1846
    %1849 = vst [vmem:[#allocation11] sm:$0x3] %v1848
    // Predicated region
    $region46: #{tpu_custom_call.1} parent=1 // pred_check
      _
    $region47: #{tpu_custom_call.1} parent=1 // pred_check_branch
      %1851 = sbr.rel (0) target = $region49
    $region48: #{tpu_custom_call.1} parent=1 // pred_region
      %s1853 = ssub.s32 32, 32
      %1854 = vsyncadd [#allocation4], %s1853
      %s1856 = sshll.u32 [#allocation11], 4
      %s1857 = int_to_ptr.vmem [resolvable:$true] %s1856
      %1859 = dma.vmem_to_hbm [thread:$0]  %s1857, 32, %s6, [#allocation4]
    $region49: #{tpu_custom_call.1} parent=1 // pred_fallthru
      _
    // Predicated region
    $region50: #{tpu_custom_call.1} parent=1 // pred_check
      _
    $region51: #{tpu_custom_call.1} parent=1 // pred_check_branch
      %1861 = sbr.rel (0) target = $region53
    $region52: #{tpu_custom_call.1} parent=1 // pred_region
      %1862 = dma.done [#allocation4], 32
    $region53: #{tpu_custom_call.1} parent=1 // pred_fallthru
      _
    %1863 = vsyncpa [#allocation3], 1
    %1864 = vsyncpa [#allocation6], 1
    %1865 = vsyncpa [#allocation9], 1
    %1866 = vsyncpa [#allocation4], 1

</llo_original>
